<compile_context>
chip_gen: v7x
topology: tpu7x:2x2x1
jax: 0.10.0
libtpu: 0.0.40
codegen_flags: <defaults>
</compile_context>

<pallas_src>
import functools

import jax
import jax.numpy as jnp
from jax.experimental import pallas as pl
from jax.experimental.pallas import tpu as pltpu


# ----------------------------------------------------------------------------
# Fused kernel
# ----------------------------------------------------------------------------
def _fused_cnn_lstm_kernel(*refs, B, T, Cin, C, H, O, num_layers):
    # inputs : x_tm, w1, b1, w2, b2, [w_ih_l, w_hh_l, b_l] * num_layers, fc_w, fc_b
    # outputs: out
    x_ref, w1_ref, b1_ref, w2_ref, b2_ref = refs[:5]
    pos = 5
    lstm_refs = [refs[pos + 3 * l: pos + 3 * l + 3] for l in range(num_layers)]
    pos += 3 * num_layers
    fcw_ref, fcb_ref, out_ref = refs[pos], refs[pos + 1], refs[pos + 2]

    f32 = jnp.float32

    def conv_relu(x_tm, w_ref, b_ref, cin):
        # x_tm : (T, B, cin) time-major activation (traced value, in vregs)
        # w_ref: (3*cin, cout) im2col-flattened conv weight;  b_ref: (1, cout)
        z = jnp.zeros((1, B, cin), f32)
        xp = jnp.concatenate([z, x_tm, z], axis=0)           # (T+2, B, cin)
        # im2col operand: one (T*B, 3*cin) lhs -> single MXU pass per conv.
        taps = jnp.concatenate(
            [xp[0:T], xp[1:T + 1], xp[2:T + 2]], axis=2)     # (T, B, 3*cin)
        lhs = taps.reshape(T * B, 3 * cin)
        y = jnp.dot(lhs, w_ref[...], preferred_element_type=f32) + b_ref[...]
        return jnp.maximum(y, 0.0)                           # (T*B, cout), time-major

    # ---- conv1 + relu, conv2 + relu (time-major throughout) -----------------
    h1 = conv_relu(x_ref[...], w1_ref, b1_ref, Cin)          # (T*B, C)
    h2 = conv_relu(h1.reshape(T, B, C), w2_ref, b2_ref, C)   # (T*B, C), rows = t*B+b

    # ---- stacked LSTM (statically unrolled over time) ------------------------
    seq = h2                                                 # (T*B, D_l) time-major
    h = jnp.zeros((B, H), f32)
    for layer in range(num_layers):
        wih_ref, whh_ref, bl_ref = lstm_refs[layer]
        # Batched input projection for the whole sequence: one MXU pass/layer.
        gx = (jnp.dot(seq, wih_ref[...], preferred_element_type=f32)
              + bl_ref[...])                                 # (T*B, 4H)
        whh = whh_ref[...]                                   # (H, 4H), hoisted
        h = jnp.zeros((B, H), f32)
        c = jnp.zeros((B, H), f32)
        hs = []
        for t in range(T):                                   # static unroll (T known)
            gates = gx[t * B:(t + 1) * B, :] + jnp.dot(
                h, whh, preferred_element_type=f32)          # (B, 4H) = one vreg
            sg = jax.nn.sigmoid(gates)                       # full-vreg EUP push
            tg = jnp.tanh(gates)                             # full-vreg EUP push
            i_g = sg[:, 0:H]
            f_g = sg[:, H:2 * H]
            o_g = sg[:, 3 * H:4 * H]
            g_g = tg[:, 2 * H:3 * H]
            c = f_g * c + i_g * g_g
            h = o_g * jnp.tanh(c)
            if layer + 1 < num_layers:
                hs.append(h)
        if layer + 1 < num_layers:
            # Hand the full sequence to the next layer, time-major, in registers
            # (no VMEM scratch round-trip).
            seq = jnp.stack(hs, axis=0).reshape(T * B, H)

    # ---- final fc on the last timestep's hidden state ------------------------
    out_ref[...] = (jnp.dot(h, fcw_ref[...], preferred_element_type=f32)
                    + fcb_ref[...])


# ----------------------------------------------------------------------------
# Host-side one-time weight re-layout (called once at model setup).
# ----------------------------------------------------------------------------
def prepare_params(params, num_layers):
    C = params['conv1_w'].shape[0]
    Cin = params['conv1_w'].shape[1]
    H = params['lstm_w_hh_0'].shape[1]
    O = params['fc_w'].shape[0]
    laid = [
        jnp.transpose(params['conv1_w'], (2, 1, 0)).reshape(3 * Cin, C),  # (3*Cin, C)
        params['conv1_b'].reshape(1, C),
        jnp.transpose(params['conv2_w'], (2, 1, 0)).reshape(3 * C, C),    # (3*C, C)
        params['conv2_b'].reshape(1, C),
    ]
    for l in range(num_layers):
        laid += [
            params[f'lstm_w_ih_{l}'].T,                                   # (D_l, 4H)
            params[f'lstm_w_hh_{l}'].T,                                   # (H, 4H)
            (params[f'lstm_b_ih_{l}']
             + params[f'lstm_b_hh_{l}']).reshape(1, 4 * H),
        ]
    laid += [params['fc_w'].T, params['fc_b'].reshape(1, O)]
    return tuple(laid)


# ----------------------------------------------------------------------------
# Wrapper: launches the single fused kernel.
# ----------------------------------------------------------------------------
@functools.partial(jax.jit, static_argnames=('hidden', 'num_layers'))
def cnn_lstm_forward(x, laid_params, hidden, num_layers):
    # x: (B, T, input_size) -- same as the PyTorch module's input
    B, T, Cin = x.shape
    C = laid_params[1].shape[1]                 # cnn_output_size
    O = laid_params[-1].shape[1]                # output_size
    H = hidden

    x_tm = jnp.transpose(x, (1, 0, 2))          # (T, B, Cin) time-major
    inputs = (x_tm,) + tuple(laid_params)

    def full_spec(a):
        nd = a.ndim
        return pl.BlockSpec(a.shape, lambda i, nd=nd: (0,) * nd)

    kernel = functools.partial(_fused_cnn_lstm_kernel, B=B, T=T, Cin=Cin, C=C,
                               H=H, O=O, num_layers=num_layers)

    return pl.pallas_call(
        kernel,
        out_shape=jax.ShapeDtypeStruct((B, O), jnp.float32),
        grid=(1,),
        in_specs=[full_spec(a) for a in inputs],
        out_specs=pl.BlockSpec((B, O), lambda i: (0, 0)),
        compiler_params=pltpu.CompilerParams(
            dimension_semantics=("arbitrary",)),
    )(*inputs)


# ----------------------------------------------------------------------------
# Pure-JAX reference (for the correctness check).
# ----------------------------------------------------------------------------
def ref_forward(x, params, hidden, num_layers):
    B, T, _ = x.shape

    def conv(xin, W, b):
        xp = jnp.pad(xin, ((0, 0), (1, 1), (0, 0)))
        y = sum(jnp.einsum('btc,oc->bto', xp[:, k:k + T, :], W[:, :, k])
                for k in range(3)) + b
        return jax.nn.relu(y)

    h = conv(x, params['conv1_w'], params['conv1_b'])
    h = conv(h, params['conv2_w'], params['conv2_b'])

    def lstm(seq, w_ih, w_hh, b_ih, b_hh):
        hst = jnp.zeros((seq.shape[0], hidden), jnp.float32)
        cst = jnp.zeros((seq.shape[0], hidden), jnp.float32)

        def step(carry, x_t):
            hh, cc = carry
            gates = x_t @ w_ih.T + b_ih + hh @ w_hh.T + b_hh
            i, f, g, o = jnp.split(gates, 4, axis=-1)
            cc = jax.nn.sigmoid(f) * cc + jax.nn.sigmoid(i) * jnp.tanh(g)
            hh = jax.nn.sigmoid(o) * jnp.tanh(cc)
            return (hh, cc), hh

        _, ys = jax.lax.scan(step, (hst, cst), jnp.transpose(seq, (1, 0, 2)))
        return jnp.transpose(ys, (1, 0, 2))

    seq = h
    for layer in range(num_layers):
        seq = lstm(seq, params[f'lstm_w_ih_{layer}'],
                   params[f'lstm_w_hh_{layer}'],
                   params[f'lstm_b_ih_{layer}'],
                   params[f'lstm_b_hh_{layer}'])
    return seq[:, -1, :] @ params['fc_w'].T + params['fc_b']


def init_params(key, input_size, cnn_out, hidden, num_layers, output_size):
    params = {}

    def uni(k, shape, fan_in):
        bound = 1.0 / jnp.sqrt(jnp.float32(fan_in))
        return jax.random.uniform(k, shape, jnp.float32, -bound, bound)

    keys = iter(jax.random.split(key, 8 + 4 * num_layers))
    params['conv1_w'] = uni(next(keys), (cnn_out, input_size, 3), input_size * 3)
    params['conv1_b'] = uni(next(keys), (cnn_out,), input_size * 3)
    params['conv2_w'] = uni(next(keys), (cnn_out, cnn_out, 3), cnn_out * 3)
    params['conv2_b'] = uni(next(keys), (cnn_out,), cnn_out * 3)
    for layer in range(num_layers):
        d_in = cnn_out if layer == 0 else hidden
        params[f'lstm_w_ih_{layer}'] = uni(next(keys), (4 * hidden, d_in), hidden)
        params[f'lstm_w_hh_{layer}'] = uni(next(keys), (4 * hidden, hidden), hidden)
        params[f'lstm_b_ih_{layer}'] = uni(next(keys), (4 * hidden,), hidden)
        params[f'lstm_b_hh_{layer}'] = uni(next(keys), (4 * hidden,), hidden)
    params['fc_w'] = uni(next(keys), (output_size, hidden), hidden)
    params['fc_b'] = uni(next(keys), (output_size,), hidden)
    return params


if __name__ == "__main__":
    config = dict(input_size=4, hidden_size=32, num_layers=2,
                  cnn_output_size=16, output_size=3)
    batch, seq_len = 2, 8

    key = jax.random.PRNGKey(0)
    k_x, k_p = jax.random.split(key)
    x = jax.random.normal(k_x, (batch, seq_len, config['input_size']),
                          jnp.float32)
    params = init_params(k_p, config['input_size'], config['cnn_output_size'],
                         config['hidden_size'], config['num_layers'],
                         config['output_size'])

    # One-time host-side weight re-layout (outside the jitted forward).
    laid = prepare_params(params, config['num_layers'])

    out = cnn_lstm_forward(x, laid, hidden=config['hidden_size'],
                           num_layers=config['num_layers'])
    out = jax.block_until_ready(out)

    ref = jax.block_until_ready(
        ref_forward(x, params, config['hidden_size'], config['num_layers']))

    assert out.shape == (batch, config['output_size']), out.shape
    assert jnp.all(jnp.isfinite(out))
    assert jnp.allclose(out, ref, rtol=2e-3, atol=2e-3), (
        f"max abs diff {jnp.max(jnp.abs(out - ref))}")

    print("KERNEL_OK")
</pallas_src>

<mosaic_0001>
module attributes {stable_mosaic.version = 11 : i64} {
  func.func @_fused_cnn_lstm_kernel(%arg0: i32, %arg1: memref<8x2x4xf32, #tpu.memory_space<vmem>>, %arg2: memref<12x16xf32, #tpu.memory_space<vmem>>, %arg3: memref<1x16xf32, #tpu.memory_space<vmem>>, %arg4: memref<48x16xf32, #tpu.memory_space<vmem>>, %arg5: memref<1x16xf32, #tpu.memory_space<vmem>>, %arg6: memref<16x128xf32, #tpu.memory_space<vmem>>, %arg7: memref<32x128xf32, #tpu.memory_space<vmem>>, %arg8: memref<1x128xf32, #tpu.memory_space<vmem>>, %arg9: memref<32x128xf32, #tpu.memory_space<vmem>>, %arg10: memref<32x128xf32, #tpu.memory_space<vmem>>, %arg11: memref<1x128xf32, #tpu.memory_space<vmem>>, %arg12: memref<32x3xf32, #tpu.memory_space<vmem>>, %arg13: memref<1x3xf32, #tpu.memory_space<vmem>>, %arg14: memref<2x3xf32, #tpu.memory_space<vmem>>) attributes {dimension_semantics = [#tpu.dimension_semantics<arbitrary>], iteration_bounds = array<i64: 1>, scalar_prefetch = 0 : i64, scratch_operands = 0 : i64, tpu.core_type = #tpu.core_type<tc>, window_params = [{pipeline_mode = #tpu.pipeline_mode<synchronous>, transform_indices = @transform_0, window_bounds = array<i64: 8, 2, 4>}, {pipeline_mode = #tpu.pipeline_mode<synchronous>, transform_indices = @transform_1, window_bounds = array<i64: 12, 16>}, {pipeline_mode = #tpu.pipeline_mode<synchronous>, transform_indices = @transform_2, window_bounds = array<i64: 1, 16>}, {pipeline_mode = #tpu.pipeline_mode<synchronous>, transform_indices = @transform_3, window_bounds = array<i64: 48, 16>}, {pipeline_mode = #tpu.pipeline_mode<synchronous>, transform_indices = @transform_4, window_bounds = array<i64: 1, 16>}, {pipeline_mode = #tpu.pipeline_mode<synchronous>, transform_indices = @transform_5, window_bounds = array<i64: 16, 128>}, {pipeline_mode = #tpu.pipeline_mode<synchronous>, transform_indices = @transform_6, window_bounds = array<i64: 32, 128>}, {pipeline_mode = #tpu.pipeline_mode<synchronous>, transform_indices = @transform_7, window_bounds = array<i64: 1, 128>}, {pipeline_mode = #tpu.pipeline_mode<synchronous>, transform_indices = @transform_8, window_bounds = array<i64: 32, 128>}, {pipeline_mode = #tpu.pipeline_mode<synchronous>, transform_indices = @transform_9, window_bounds = array<i64: 32, 128>}, {pipeline_mode = #tpu.pipeline_mode<synchronous>, transform_indices = @transform_10, window_bounds = array<i64: 1, 128>}, {pipeline_mode = #tpu.pipeline_mode<synchronous>, transform_indices = @transform_11, window_bounds = array<i64: 32, 3>}, {pipeline_mode = #tpu.pipeline_mode<synchronous>, transform_indices = @transform_12, window_bounds = array<i64: 1, 3>}, {pipeline_mode = #tpu.pipeline_mode<synchronous>, transform_indices = @transform_13, window_bounds = array<i64: 2, 3>}]} {
    %c0 = arith.constant 0 : index
    %c0_0 = arith.constant 0 : index
    %c0_1 = arith.constant 0 : index
    %0 = vector.load %arg1[%c0, %c0_0, %c0_1] : memref<8x2x4xf32, #tpu.memory_space<vmem>>, vector<8x2x4xf32>
    %cst = arith.constant 0.000000e+00 : f32
    %1 = vector.broadcast %cst : f32 to vector<1x2x4xf32>
    %2 = tpu.concatenate %1, %0, %1 in 0 : vector<1x2x4xf32>, vector<8x2x4xf32>, vector<1x2x4xf32> -> vector<10x2x4xf32>
    %3 = vector.extract_strided_slice %2 {offsets = [0, 0, 0], sizes = [8, 2, 4], strides = [1, 1, 1]} : vector<10x2x4xf32> to vector<8x2x4xf32>
    %4 = vector.extract_strided_slice %2 {offsets = [1, 0, 0], sizes = [8, 2, 4], strides = [1, 1, 1]} : vector<10x2x4xf32> to vector<8x2x4xf32>
    %5 = vector.extract_strided_slice %2 {offsets = [2, 0, 0], sizes = [8, 2, 4], strides = [1, 1, 1]} : vector<10x2x4xf32> to vector<8x2x4xf32>
    %6 = tpu.concatenate %3, %4, %5 in 2 : vector<8x2x4xf32>, vector<8x2x4xf32>, vector<8x2x4xf32> -> vector<8x2x12xf32>
    %7 = vector.shape_cast %6 : vector<8x2x12xf32> to vector<16x12xf32>
    %c0_2 = arith.constant 0 : index
    %c0_3 = arith.constant 0 : index
    %8 = vector.load %arg2[%c0_2, %c0_3] : memref<12x16xf32, #tpu.memory_space<vmem>>, vector<12x16xf32>
    %cst_4 = arith.constant dense<0.000000e+00> : vector<16x16xf32>
    %9 = tpu.matmul %7, %8, %cst_4 {dimension_numbers = #tpu.dot_dimension_numbers<[1], [0], [0], [1], [0, 0, 1, 1], [], []>} : vector<16x12xf32>, vector<12x16xf32>, vector<16x16xf32> -> vector<16x16xf32>
    %c0_5 = arith.constant 0 : index
    %c0_6 = arith.constant 0 : index
    %10 = vector.load %arg3[%c0_5, %c0_6] : memref<1x16xf32, #tpu.memory_space<vmem>>, vector<1x16xf32>
    %11 = vector.broadcast %10 : vector<1x16xf32> to vector<16x16xf32>
    %12 = arith.addf %9, %11 : vector<16x16xf32>
    %cst_7 = arith.constant 0.000000e+00 : f32
    %13 = vector.broadcast %cst_7 : f32 to vector<16x16xf32>
    %14 = arith.maximumf %12, %13 : vector<16x16xf32>
    %15 = vector.shape_cast %14 : vector<16x16xf32> to vector<8x2x16xf32>
    %cst_8 = arith.constant 0.000000e+00 : f32
    %16 = vector.broadcast %cst_8 : f32 to vector<1x2x16xf32>
    %17 = tpu.concatenate %16, %15, %16 in 0 : vector<1x2x16xf32>, vector<8x2x16xf32>, vector<1x2x16xf32> -> vector<10x2x16xf32>
    %18 = vector.extract_strided_slice %17 {offsets = [0, 0, 0], sizes = [8, 2, 16], strides = [1, 1, 1]} : vector<10x2x16xf32> to vector<8x2x16xf32>
    %19 = vector.extract_strided_slice %17 {offsets = [1, 0, 0], sizes = [8, 2, 16], strides = [1, 1, 1]} : vector<10x2x16xf32> to vector<8x2x16xf32>
    %20 = vector.extract_strided_slice %17 {offsets = [2, 0, 0], sizes = [8, 2, 16], strides = [1, 1, 1]} : vector<10x2x16xf32> to vector<8x2x16xf32>
    %21 = tpu.concatenate %18, %19, %20 in 2 : vector<8x2x16xf32>, vector<8x2x16xf32>, vector<8x2x16xf32> -> vector<8x2x48xf32>
    %22 = vector.shape_cast %21 : vector<8x2x48xf32> to vector<16x48xf32>
    %c0_9 = arith.constant 0 : index
    %c0_10 = arith.constant 0 : index
    %23 = vector.load %arg4[%c0_9, %c0_10] : memref<48x16xf32, #tpu.memory_space<vmem>>, vector<48x16xf32>
    %cst_11 = arith.constant dense<0.000000e+00> : vector<16x16xf32>
    %24 = tpu.matmul %22, %23, %cst_11 {dimension_numbers = #tpu.dot_dimension_numbers<[1], [0], [0], [1], [0, 0, 1, 1], [], []>} : vector<16x48xf32>, vector<48x16xf32>, vector<16x16xf32> -> vector<16x16xf32>
    %c0_12 = arith.constant 0 : index
    %c0_13 = arith.constant 0 : index
    %25 = vector.load %arg5[%c0_12, %c0_13] : memref<1x16xf32, #tpu.memory_space<vmem>>, vector<1x16xf32>
    %26 = vector.broadcast %25 : vector<1x16xf32> to vector<16x16xf32>
    %27 = arith.addf %24, %26 : vector<16x16xf32>
    %cst_14 = arith.constant 0.000000e+00 : f32
    %28 = vector.broadcast %cst_14 : f32 to vector<16x16xf32>
    %29 = arith.maximumf %27, %28 : vector<16x16xf32>
    %c0_15 = arith.constant 0 : index
    %c0_16 = arith.constant 0 : index
    %30 = vector.load %arg6[%c0_15, %c0_16] : memref<16x128xf32, #tpu.memory_space<vmem>>, vector<16x128xf32>
    %cst_17 = arith.constant dense<0.000000e+00> : vector<16x128xf32>
    %31 = tpu.matmul %29, %30, %cst_17 {dimension_numbers = #tpu.dot_dimension_numbers<[1], [0], [0], [1], [0, 0, 1, 1], [], []>} : vector<16x16xf32>, vector<16x128xf32>, vector<16x128xf32> -> vector<16x128xf32>
    %c0_18 = arith.constant 0 : index
    %c0_19 = arith.constant 0 : index
    %32 = vector.load %arg8[%c0_18, %c0_19] : memref<1x128xf32, #tpu.memory_space<vmem>>, vector<1x128xf32>
    %33 = vector.broadcast %32 : vector<1x128xf32> to vector<16x128xf32>
    %34 = arith.addf %31, %33 : vector<16x128xf32>
    %c0_20 = arith.constant 0 : index
    %c0_21 = arith.constant 0 : index
    %35 = vector.load %arg7[%c0_20, %c0_21] : memref<32x128xf32, #tpu.memory_space<vmem>>, vector<32x128xf32>
    %cst_22 = arith.constant 0.000000e+00 : f32
    %36 = vector.broadcast %cst_22 : f32 to vector<2x32xf32>
    %cst_23 = arith.constant 0.000000e+00 : f32
    %37 = vector.broadcast %cst_23 : f32 to vector<2x32xf32>
    %38 = vector.extract_strided_slice %34 {offsets = [0, 0], sizes = [2, 128], strides = [1, 1]} : vector<16x128xf32> to vector<2x128xf32>
    %cst_24 = arith.constant dense<0.000000e+00> : vector<2x128xf32>
    %39 = tpu.matmul %36, %35, %cst_24 {dimension_numbers = #tpu.dot_dimension_numbers<[1], [0], [0], [1], [0, 0, 1, 1], [], []>} : vector<2x32xf32>, vector<32x128xf32>, vector<2x128xf32> -> vector<2x128xf32>
    %40 = arith.addf %38, %39 : vector<2x128xf32>
    %41 = arith.negf %40 : vector<2x128xf32>
    %42 = math.exp %41 : vector<2x128xf32>
    %cst_25 = arith.constant 1.000000e+00 : f32
    %43 = vector.broadcast %cst_25 : f32 to vector<2x128xf32>
    %44 = arith.addf %43, %42 : vector<2x128xf32>
    %45 = arith.divf %43, %44 : vector<2x128xf32>
    %46 = math.tanh %40 : vector<2x128xf32>
    %47 = vector.extract_strided_slice %45 {offsets = [0, 0], sizes = [2, 32], strides = [1, 1]} : vector<2x128xf32> to vector<2x32xf32>
    %48 = vector.extract_strided_slice %45 {offsets = [0, 32], sizes = [2, 32], strides = [1, 1]} : vector<2x128xf32> to vector<2x32xf32>
    %49 = vector.extract_strided_slice %45 {offsets = [0, 96], sizes = [2, 32], strides = [1, 1]} : vector<2x128xf32> to vector<2x32xf32>
    %50 = vector.extract_strided_slice %46 {offsets = [0, 64], sizes = [2, 32], strides = [1, 1]} : vector<2x128xf32> to vector<2x32xf32>
    %51 = arith.mulf %48, %37 : vector<2x32xf32>
    %52 = arith.mulf %47, %50 : vector<2x32xf32>
    %53 = arith.addf %51, %52 : vector<2x32xf32>
    %54 = math.tanh %53 : vector<2x32xf32>
    %55 = arith.mulf %49, %54 : vector<2x32xf32>
    %56 = vector.extract_strided_slice %34 {offsets = [2, 0], sizes = [2, 128], strides = [1, 1]} : vector<16x128xf32> to vector<2x128xf32>
    %cst_26 = arith.constant dense<0.000000e+00> : vector<2x128xf32>
    %57 = tpu.matmul %55, %35, %cst_26 {dimension_numbers = #tpu.dot_dimension_numbers<[1], [0], [0], [1], [0, 0, 1, 1], [], []>} : vector<2x32xf32>, vector<32x128xf32>, vector<2x128xf32> -> vector<2x128xf32>
    %58 = arith.addf %56, %57 : vector<2x128xf32>
    %59 = arith.negf %58 : vector<2x128xf32>
    %60 = math.exp %59 : vector<2x128xf32>
    %cst_27 = arith.constant 1.000000e+00 : f32
    %61 = vector.broadcast %cst_27 : f32 to vector<2x128xf32>
    %62 = arith.addf %61, %60 : vector<2x128xf32>
    %63 = arith.divf %61, %62 : vector<2x128xf32>
    %64 = math.tanh %58 : vector<2x128xf32>
    %65 = vector.extract_strided_slice %63 {offsets = [0, 0], sizes = [2, 32], strides = [1, 1]} : vector<2x128xf32> to vector<2x32xf32>
    %66 = vector.extract_strided_slice %63 {offsets = [0, 32], sizes = [2, 32], strides = [1, 1]} : vector<2x128xf32> to vector<2x32xf32>
    %67 = vector.extract_strided_slice %63 {offsets = [0, 96], sizes = [2, 32], strides = [1, 1]} : vector<2x128xf32> to vector<2x32xf32>
    %68 = vector.extract_strided_slice %64 {offsets = [0, 64], sizes = [2, 32], strides = [1, 1]} : vector<2x128xf32> to vector<2x32xf32>
    %69 = arith.mulf %66, %53 : vector<2x32xf32>
    %70 = arith.mulf %65, %68 : vector<2x32xf32>
    %71 = arith.addf %69, %70 : vector<2x32xf32>
    %72 = math.tanh %71 : vector<2x32xf32>
    %73 = arith.mulf %67, %72 : vector<2x32xf32>
    %74 = vector.extract_strided_slice %34 {offsets = [4, 0], sizes = [2, 128], strides = [1, 1]} : vector<16x128xf32> to vector<2x128xf32>
    %cst_28 = arith.constant dense<0.000000e+00> : vector<2x128xf32>
    %75 = tpu.matmul %73, %35, %cst_28 {dimension_numbers = #tpu.dot_dimension_numbers<[1], [0], [0], [1], [0, 0, 1, 1], [], []>} : vector<2x32xf32>, vector<32x128xf32>, vector<2x128xf32> -> vector<2x128xf32>
    %76 = arith.addf %74, %75 : vector<2x128xf32>
    %77 = arith.negf %76 : vector<2x128xf32>
    %78 = math.exp %77 : vector<2x128xf32>
    %cst_29 = arith.constant 1.000000e+00 : f32
    %79 = vector.broadcast %cst_29 : f32 to vector<2x128xf32>
    %80 = arith.addf %79, %78 : vector<2x128xf32>
    %81 = arith.divf %79, %80 : vector<2x128xf32>
    %82 = math.tanh %76 : vector<2x128xf32>
    %83 = vector.extract_strided_slice %81 {offsets = [0, 0], sizes = [2, 32], strides = [1, 1]} : vector<2x128xf32> to vector<2x32xf32>
    %84 = vector.extract_strided_slice %81 {offsets = [0, 32], sizes = [2, 32], strides = [1, 1]} : vector<2x128xf32> to vector<2x32xf32>
    %85 = vector.extract_strided_slice %81 {offsets = [0, 96], sizes = [2, 32], strides = [1, 1]} : vector<2x128xf32> to vector<2x32xf32>
    %86 = vector.extract_strided_slice %82 {offsets = [0, 64], sizes = [2, 32], strides = [1, 1]} : vector<2x128xf32> to vector<2x32xf32>
    %87 = arith.mulf %84, %71 : vector<2x32xf32>
    %88 = arith.mulf %83, %86 : vector<2x32xf32>
    %89 = arith.addf %87, %88 : vector<2x32xf32>
    %90 = math.tanh %89 : vector<2x32xf32>
    %91 = arith.mulf %85, %90 : vector<2x32xf32>
    %92 = vector.extract_strided_slice %34 {offsets = [6, 0], sizes = [2, 128], strides = [1, 1]} : vector<16x128xf32> to vector<2x128xf32>
    %cst_30 = arith.constant dense<0.000000e+00> : vector<2x128xf32>
    %93 = tpu.matmul %91, %35, %cst_30 {dimension_numbers = #tpu.dot_dimension_numbers<[1], [0], [0], [1], [0, 0, 1, 1], [], []>} : vector<2x32xf32>, vector<32x128xf32>, vector<2x128xf32> -> vector<2x128xf32>
    %94 = arith.addf %92, %93 : vector<2x128xf32>
    %95 = arith.negf %94 : vector<2x128xf32>
    %96 = math.exp %95 : vector<2x128xf32>
    %cst_31 = arith.constant 1.000000e+00 : f32
    %97 = vector.broadcast %cst_31 : f32 to vector<2x128xf32>
    %98 = arith.addf %97, %96 : vector<2x128xf32>
    %99 = arith.divf %97, %98 : vector<2x128xf32>
    %100 = math.tanh %94 : vector<2x128xf32>
    %101 = vector.extract_strided_slice %99 {offsets = [0, 0], sizes = [2, 32], strides = [1, 1]} : vector<2x128xf32> to vector<2x32xf32>
    %102 = vector.extract_strided_slice %99 {offsets = [0, 32], sizes = [2, 32], strides = [1, 1]} : vector<2x128xf32> to vector<2x32xf32>
    %103 = vector.extract_strided_slice %99 {offsets = [0, 96], sizes = [2, 32], strides = [1, 1]} : vector<2x128xf32> to vector<2x32xf32>
    %104 = vector.extract_strided_slice %100 {offsets = [0, 64], sizes = [2, 32], strides = [1, 1]} : vector<2x128xf32> to vector<2x32xf32>
    %105 = arith.mulf %102, %89 : vector<2x32xf32>
    %106 = arith.mulf %101, %104 : vector<2x32xf32>
    %107 = arith.addf %105, %106 : vector<2x32xf32>
    %108 = math.tanh %107 : vector<2x32xf32>
    %109 = arith.mulf %103, %108 : vector<2x32xf32>
    %110 = vector.extract_strided_slice %34 {offsets = [8, 0], sizes = [2, 128], strides = [1, 1]} : vector<16x128xf32> to vector<2x128xf32>
    %cst_32 = arith.constant dense<0.000000e+00> : vector<2x128xf32>
    %111 = tpu.matmul %109, %35, %cst_32 {dimension_numbers = #tpu.dot_dimension_numbers<[1], [0], [0], [1], [0, 0, 1, 1], [], []>} : vector<2x32xf32>, vector<32x128xf32>, vector<2x128xf32> -> vector<2x128xf32>
    %112 = arith.addf %110, %111 : vector<2x128xf32>
    %113 = arith.negf %112 : vector<2x128xf32>
    %114 = math.exp %113 : vector<2x128xf32>
    %cst_33 = arith.constant 1.000000e+00 : f32
    %115 = vector.broadcast %cst_33 : f32 to vector<2x128xf32>
    %116 = arith.addf %115, %114 : vector<2x128xf32>
    %117 = arith.divf %115, %116 : vector<2x128xf32>
    %118 = math.tanh %112 : vector<2x128xf32>
    %119 = vector.extract_strided_slice %117 {offsets = [0, 0], sizes = [2, 32], strides = [1, 1]} : vector<2x128xf32> to vector<2x32xf32>
    %120 = vector.extract_strided_slice %117 {offsets = [0, 32], sizes = [2, 32], strides = [1, 1]} : vector<2x128xf32> to vector<2x32xf32>
    %121 = vector.extract_strided_slice %117 {offsets = [0, 96], sizes = [2, 32], strides = [1, 1]} : vector<2x128xf32> to vector<2x32xf32>
    %122 = vector.extract_strided_slice %118 {offsets = [0, 64], sizes = [2, 32], strides = [1, 1]} : vector<2x128xf32> to vector<2x32xf32>
    %123 = arith.mulf %120, %107 : vector<2x32xf32>
    %124 = arith.mulf %119, %122 : vector<2x32xf32>
    %125 = arith.addf %123, %124 : vector<2x32xf32>
    %126 = math.tanh %125 : vector<2x32xf32>
    %127 = arith.mulf %121, %126 : vector<2x32xf32>
    %128 = vector.extract_strided_slice %34 {offsets = [10, 0], sizes = [2, 128], strides = [1, 1]} : vector<16x128xf32> to vector<2x128xf32>
    %cst_34 = arith.constant dense<0.000000e+00> : vector<2x128xf32>
    %129 = tpu.matmul %127, %35, %cst_34 {dimension_numbers = #tpu.dot_dimension_numbers<[1], [0], [0], [1], [0, 0, 1, 1], [], []>} : vector<2x32xf32>, vector<32x128xf32>, vector<2x128xf32> -> vector<2x128xf32>
    %130 = arith.addf %128, %129 : vector<2x128xf32>
    %131 = arith.negf %130 : vector<2x128xf32>
    %132 = math.exp %131 : vector<2x128xf32>
    %cst_35 = arith.constant 1.000000e+00 : f32
    %133 = vector.broadcast %cst_35 : f32 to vector<2x128xf32>
    %134 = arith.addf %133, %132 : vector<2x128xf32>
    %135 = arith.divf %133, %134 : vector<2x128xf32>
    %136 = math.tanh %130 : vector<2x128xf32>
    %137 = vector.extract_strided_slice %135 {offsets = [0, 0], sizes = [2, 32], strides = [1, 1]} : vector<2x128xf32> to vector<2x32xf32>
    %138 = vector.extract_strided_slice %135 {offsets = [0, 32], sizes = [2, 32], strides = [1, 1]} : vector<2x128xf32> to vector<2x32xf32>
    %139 = vector.extract_strided_slice %135 {offsets = [0, 96], sizes = [2, 32], strides = [1, 1]} : vector<2x128xf32> to vector<2x32xf32>
    %140 = vector.extract_strided_slice %136 {offsets = [0, 64], sizes = [2, 32], strides = [1, 1]} : vector<2x128xf32> to vector<2x32xf32>
    %141 = arith.mulf %138, %125 : vector<2x32xf32>
    %142 = arith.mulf %137, %140 : vector<2x32xf32>
    %143 = arith.addf %141, %142 : vector<2x32xf32>
    %144 = math.tanh %143 : vector<2x32xf32>
    %145 = arith.mulf %139, %144 : vector<2x32xf32>
    %146 = vector.extract_strided_slice %34 {offsets = [12, 0], sizes = [2, 128], strides = [1, 1]} : vector<16x128xf32> to vector<2x128xf32>
    %cst_36 = arith.constant dense<0.000000e+00> : vector<2x128xf32>
    %147 = tpu.matmul %145, %35, %cst_36 {dimension_numbers = #tpu.dot_dimension_numbers<[1], [0], [0], [1], [0, 0, 1, 1], [], []>} : vector<2x32xf32>, vector<32x128xf32>, vector<2x128xf32> -> vector<2x128xf32>
    %148 = arith.addf %146, %147 : vector<2x128xf32>
    %149 = arith.negf %148 : vector<2x128xf32>
    %150 = math.exp %149 : vector<2x128xf32>
    %cst_37 = arith.constant 1.000000e+00 : f32
    %151 = vector.broadcast %cst_37 : f32 to vector<2x128xf32>
    %152 = arith.addf %151, %150 : vector<2x128xf32>
    %153 = arith.divf %151, %152 : vector<2x128xf32>
    %154 = math.tanh %148 : vector<2x128xf32>
    %155 = vector.extract_strided_slice %153 {offsets = [0, 0], sizes = [2, 32], strides = [1, 1]} : vector<2x128xf32> to vector<2x32xf32>
    %156 = vector.extract_strided_slice %153 {offsets = [0, 32], sizes = [2, 32], strides = [1, 1]} : vector<2x128xf32> to vector<2x32xf32>
    %157 = vector.extract_strided_slice %153 {offsets = [0, 96], sizes = [2, 32], strides = [1, 1]} : vector<2x128xf32> to vector<2x32xf32>
    %158 = vector.extract_strided_slice %154 {offsets = [0, 64], sizes = [2, 32], strides = [1, 1]} : vector<2x128xf32> to vector<2x32xf32>
    %159 = arith.mulf %156, %143 : vector<2x32xf32>
    %160 = arith.mulf %155, %158 : vector<2x32xf32>
    %161 = arith.addf %159, %160 : vector<2x32xf32>
    %162 = math.tanh %161 : vector<2x32xf32>
    %163 = arith.mulf %157, %162 : vector<2x32xf32>
    %164 = vector.extract_strided_slice %34 {offsets = [14, 0], sizes = [2, 128], strides = [1, 1]} : vector<16x128xf32> to vector<2x128xf32>
    %cst_38 = arith.constant dense<0.000000e+00> : vector<2x128xf32>
    %165 = tpu.matmul %163, %35, %cst_38 {dimension_numbers = #tpu.dot_dimension_numbers<[1], [0], [0], [1], [0, 0, 1, 1], [], []>} : vector<2x32xf32>, vector<32x128xf32>, vector<2x128xf32> -> vector<2x128xf32>
    %166 = arith.addf %164, %165 : vector<2x128xf32>
    %167 = arith.negf %166 : vector<2x128xf32>
    %168 = math.exp %167 : vector<2x128xf32>
    %cst_39 = arith.constant 1.000000e+00 : f32
    %169 = vector.broadcast %cst_39 : f32 to vector<2x128xf32>
    %170 = arith.addf %169, %168 : vector<2x128xf32>
    %171 = arith.divf %169, %170 : vector<2x128xf32>
    %172 = math.tanh %166 : vector<2x128xf32>
    %173 = vector.extract_strided_slice %171 {offsets = [0, 0], sizes = [2, 32], strides = [1, 1]} : vector<2x128xf32> to vector<2x32xf32>
    %174 = vector.extract_strided_slice %171 {offsets = [0, 32], sizes = [2, 32], strides = [1, 1]} : vector<2x128xf32> to vector<2x32xf32>
    %175 = vector.extract_strided_slice %171 {offsets = [0, 96], sizes = [2, 32], strides = [1, 1]} : vector<2x128xf32> to vector<2x32xf32>
    %176 = vector.extract_strided_slice %172 {offsets = [0, 64], sizes = [2, 32], strides = [1, 1]} : vector<2x128xf32> to vector<2x32xf32>
    %177 = arith.mulf %174, %161 : vector<2x32xf32>
    %178 = arith.mulf %173, %176 : vector<2x32xf32>
    %179 = arith.addf %177, %178 : vector<2x32xf32>
    %180 = math.tanh %179 : vector<2x32xf32>
    %181 = arith.mulf %175, %180 : vector<2x32xf32>
    %182 = vector.shape_cast %55 : vector<2x32xf32> to vector<1x2x32xf32>
    %183 = vector.shape_cast %73 : vector<2x32xf32> to vector<1x2x32xf32>
    %184 = vector.shape_cast %91 : vector<2x32xf32> to vector<1x2x32xf32>
    %185 = vector.shape_cast %109 : vector<2x32xf32> to vector<1x2x32xf32>
    %186 = vector.shape_cast %127 : vector<2x32xf32> to vector<1x2x32xf32>
    %187 = vector.shape_cast %145 : vector<2x32xf32> to vector<1x2x32xf32>
    %188 = vector.shape_cast %163 : vector<2x32xf32> to vector<1x2x32xf32>
    %189 = vector.shape_cast %181 : vector<2x32xf32> to vector<1x2x32xf32>
    %190 = tpu.concatenate %182, %183, %184, %185, %186, %187, %188, %189 in 0 : vector<1x2x32xf32>, vector<1x2x32xf32>, vector<1x2x32xf32>, vector<1x2x32xf32>, vector<1x2x32xf32>, vector<1x2x32xf32>, vector<1x2x32xf32>, vector<1x2x32xf32> -> vector<8x2x32xf32>
    %191 = vector.shape_cast %190 : vector<8x2x32xf32> to vector<16x32xf32>
    %c0_40 = arith.constant 0 : index
    %c0_41 = arith.constant 0 : index
    %192 = vector.load %arg9[%c0_40, %c0_41] : memref<32x128xf32, #tpu.memory_space<vmem>>, vector<32x128xf32>
    %cst_42 = arith.constant dense<0.000000e+00> : vector<16x128xf32>
    %193 = tpu.matmul %191, %192, %cst_42 {dimension_numbers = #tpu.dot_dimension_numbers<[1], [0], [0], [1], [0, 0, 1, 1], [], []>} : vector<16x32xf32>, vector<32x128xf32>, vector<16x128xf32> -> vector<16x128xf32>
    %c0_43 = arith.constant 0 : index
    %c0_44 = arith.constant 0 : index
    %194 = vector.load %arg11[%c0_43, %c0_44] : memref<1x128xf32, #tpu.memory_space<vmem>>, vector<1x128xf32>
    %195 = vector.broadcast %194 : vector<1x128xf32> to vector<16x128xf32>
    %196 = arith.addf %193, %195 : vector<16x128xf32>
    %c0_45 = arith.constant 0 : index
    %c0_46 = arith.constant 0 : index
    %197 = vector.load %arg10[%c0_45, %c0_46] : memref<32x128xf32, #tpu.memory_space<vmem>>, vector<32x128xf32>
    %cst_47 = arith.constant 0.000000e+00 : f32
    %198 = vector.broadcast %cst_47 : f32 to vector<2x32xf32>
    %cst_48 = arith.constant 0.000000e+00 : f32
    %199 = vector.broadcast %cst_48 : f32 to vector<2x32xf32>
    %200 = vector.extract_strided_slice %196 {offsets = [0, 0], sizes = [2, 128], strides = [1, 1]} : vector<16x128xf32> to vector<2x128xf32>
    %cst_49 = arith.constant dense<0.000000e+00> : vector<2x128xf32>
    %201 = tpu.matmul %198, %197, %cst_49 {dimension_numbers = #tpu.dot_dimension_numbers<[1], [0], [0], [1], [0, 0, 1, 1], [], []>} : vector<2x32xf32>, vector<32x128xf32>, vector<2x128xf32> -> vector<2x128xf32>
    %202 = arith.addf %200, %201 : vector<2x128xf32>
    %203 = arith.negf %202 : vector<2x128xf32>
    %204 = math.exp %203 : vector<2x128xf32>
    %cst_50 = arith.constant 1.000000e+00 : f32
    %205 = vector.broadcast %cst_50 : f32 to vector<2x128xf32>
    %206 = arith.addf %205, %204 : vector<2x128xf32>
    %207 = arith.divf %205, %206 : vector<2x128xf32>
    %208 = math.tanh %202 : vector<2x128xf32>
    %209 = vector.extract_strided_slice %207 {offsets = [0, 0], sizes = [2, 32], strides = [1, 1]} : vector<2x128xf32> to vector<2x32xf32>
    %210 = vector.extract_strided_slice %207 {offsets = [0, 32], sizes = [2, 32], strides = [1, 1]} : vector<2x128xf32> to vector<2x32xf32>
    %211 = vector.extract_strided_slice %207 {offsets = [0, 96], sizes = [2, 32], strides = [1, 1]} : vector<2x128xf32> to vector<2x32xf32>
    %212 = vector.extract_strided_slice %208 {offsets = [0, 64], sizes = [2, 32], strides = [1, 1]} : vector<2x128xf32> to vector<2x32xf32>
    %213 = arith.mulf %210, %199 : vector<2x32xf32>
    %214 = arith.mulf %209, %212 : vector<2x32xf32>
    %215 = arith.addf %213, %214 : vector<2x32xf32>
    %216 = math.tanh %215 : vector<2x32xf32>
    %217 = arith.mulf %211, %216 : vector<2x32xf32>
    %218 = vector.extract_strided_slice %196 {offsets = [2, 0], sizes = [2, 128], strides = [1, 1]} : vector<16x128xf32> to vector<2x128xf32>
    %cst_51 = arith.constant dense<0.000000e+00> : vector<2x128xf32>
    %219 = tpu.matmul %217, %197, %cst_51 {dimension_numbers = #tpu.dot_dimension_numbers<[1], [0], [0], [1], [0, 0, 1, 1], [], []>} : vector<2x32xf32>, vector<32x128xf32>, vector<2x128xf32> -> vector<2x128xf32>
    %220 = arith.addf %218, %219 : vector<2x128xf32>
    %221 = arith.negf %220 : vector<2x128xf32>
    %222 = math.exp %221 : vector<2x128xf32>
    %cst_52 = arith.constant 1.000000e+00 : f32
    %223 = vector.broadcast %cst_52 : f32 to vector<2x128xf32>
    %224 = arith.addf %223, %222 : vector<2x128xf32>
    %225 = arith.divf %223, %224 : vector<2x128xf32>
    %226 = math.tanh %220 : vector<2x128xf32>
    %227 = vector.extract_strided_slice %225 {offsets = [0, 0], sizes = [2, 32], strides = [1, 1]} : vector<2x128xf32> to vector<2x32xf32>
    %228 = vector.extract_strided_slice %225 {offsets = [0, 32], sizes = [2, 32], strides = [1, 1]} : vector<2x128xf32> to vector<2x32xf32>
    %229 = vector.extract_strided_slice %225 {offsets = [0, 96], sizes = [2, 32], strides = [1, 1]} : vector<2x128xf32> to vector<2x32xf32>
    %230 = vector.extract_strided_slice %226 {offsets = [0, 64], sizes = [2, 32], strides = [1, 1]} : vector<2x128xf32> to vector<2x32xf32>
    %231 = arith.mulf %228, %215 : vector<2x32xf32>
    %232 = arith.mulf %227, %230 : vector<2x32xf32>
    %233 = arith.addf %231, %232 : vector<2x32xf32>
    %234 = math.tanh %233 : vector<2x32xf32>
    %235 = arith.mulf %229, %234 : vector<2x32xf32>
    %236 = vector.extract_strided_slice %196 {offsets = [4, 0], sizes = [2, 128], strides = [1, 1]} : vector<16x128xf32> to vector<2x128xf32>
    %cst_53 = arith.constant dense<0.000000e+00> : vector<2x128xf32>
    %237 = tpu.matmul %235, %197, %cst_53 {dimension_numbers = #tpu.dot_dimension_numbers<[1], [0], [0], [1], [0, 0, 1, 1], [], []>} : vector<2x32xf32>, vector<32x128xf32>, vector<2x128xf32> -> vector<2x128xf32>
    %238 = arith.addf %236, %237 : vector<2x128xf32>
    %239 = arith.negf %238 : vector<2x128xf32>
    %240 = math.exp %239 : vector<2x128xf32>
    %cst_54 = arith.constant 1.000000e+00 : f32
    %241 = vector.broadcast %cst_54 : f32 to vector<2x128xf32>
    %242 = arith.addf %241, %240 : vector<2x128xf32>
    %243 = arith.divf %241, %242 : vector<2x128xf32>
    %244 = math.tanh %238 : vector<2x128xf32>
    %245 = vector.extract_strided_slice %243 {offsets = [0, 0], sizes = [2, 32], strides = [1, 1]} : vector<2x128xf32> to vector<2x32xf32>
    %246 = vector.extract_strided_slice %243 {offsets = [0, 32], sizes = [2, 32], strides = [1, 1]} : vector<2x128xf32> to vector<2x32xf32>
    %247 = vector.extract_strided_slice %243 {offsets = [0, 96], sizes = [2, 32], strides = [1, 1]} : vector<2x128xf32> to vector<2x32xf32>
    %248 = vector.extract_strided_slice %244 {offsets = [0, 64], sizes = [2, 32], strides = [1, 1]} : vector<2x128xf32> to vector<2x32xf32>
    %249 = arith.mulf %246, %233 : vector<2x32xf32>
    %250 = arith.mulf %245, %248 : vector<2x32xf32>
    %251 = arith.addf %249, %250 : vector<2x32xf32>
    %252 = math.tanh %251 : vector<2x32xf32>
    %253 = arith.mulf %247, %252 : vector<2x32xf32>
    %254 = vector.extract_strided_slice %196 {offsets = [6, 0], sizes = [2, 128], strides = [1, 1]} : vector<16x128xf32> to vector<2x128xf32>
    %cst_55 = arith.constant dense<0.000000e+00> : vector<2x128xf32>
    %255 = tpu.matmul %253, %197, %cst_55 {dimension_numbers = #tpu.dot_dimension_numbers<[1], [0], [0], [1], [0, 0, 1, 1], [], []>} : vector<2x32xf32>, vector<32x128xf32>, vector<2x128xf32> -> vector<2x128xf32>
    %256 = arith.addf %254, %255 : vector<2x128xf32>
    %257 = arith.negf %256 : vector<2x128xf32>
    %258 = math.exp %257 : vector<2x128xf32>
    %cst_56 = arith.constant 1.000000e+00 : f32
    %259 = vector.broadcast %cst_56 : f32 to vector<2x128xf32>
    %260 = arith.addf %259, %258 : vector<2x128xf32>
    %261 = arith.divf %259, %260 : vector<2x128xf32>
    %262 = math.tanh %256 : vector<2x128xf32>
    %263 = vector.extract_strided_slice %261 {offsets = [0, 0], sizes = [2, 32], strides = [1, 1]} : vector<2x128xf32> to vector<2x32xf32>
    %264 = vector.extract_strided_slice %261 {offsets = [0, 32], sizes = [2, 32], strides = [1, 1]} : vector<2x128xf32> to vector<2x32xf32>
    %265 = vector.extract_strided_slice %261 {offsets = [0, 96], sizes = [2, 32], strides = [1, 1]} : vector<2x128xf32> to vector<2x32xf32>
    %266 = vector.extract_strided_slice %262 {offsets = [0, 64], sizes = [2, 32], strides = [1, 1]} : vector<2x128xf32> to vector<2x32xf32>
    %267 = arith.mulf %264, %251 : vector<2x32xf32>
    %268 = arith.mulf %263, %266 : vector<2x32xf32>
    %269 = arith.addf %267, %268 : vector<2x32xf32>
    %270 = math.tanh %269 : vector<2x32xf32>
    %271 = arith.mulf %265, %270 : vector<2x32xf32>
    %272 = vector.extract_strided_slice %196 {offsets = [8, 0], sizes = [2, 128], strides = [1, 1]} : vector<16x128xf32> to vector<2x128xf32>
    %cst_57 = arith.constant dense<0.000000e+00> : vector<2x128xf32>
    %273 = tpu.matmul %271, %197, %cst_57 {dimension_numbers = #tpu.dot_dimension_numbers<[1], [0], [0], [1], [0, 0, 1, 1], [], []>} : vector<2x32xf32>, vector<32x128xf32>, vector<2x128xf32> -> vector<2x128xf32>
    %274 = arith.addf %272, %273 : vector<2x128xf32>
    %275 = arith.negf %274 : vector<2x128xf32>
    %276 = math.exp %275 : vector<2x128xf32>
    %cst_58 = arith.constant 1.000000e+00 : f32
    %277 = vector.broadcast %cst_58 : f32 to vector<2x128xf32>
    %278 = arith.addf %277, %276 : vector<2x128xf32>
    %279 = arith.divf %277, %278 : vector<2x128xf32>
    %280 = math.tanh %274 : vector<2x128xf32>
    %281 = vector.extract_strided_slice %279 {offsets = [0, 0], sizes = [2, 32], strides = [1, 1]} : vector<2x128xf32> to vector<2x32xf32>
    %282 = vector.extract_strided_slice %279 {offsets = [0, 32], sizes = [2, 32], strides = [1, 1]} : vector<2x128xf32> to vector<2x32xf32>
    %283 = vector.extract_strided_slice %279 {offsets = [0, 96], sizes = [2, 32], strides = [1, 1]} : vector<2x128xf32> to vector<2x32xf32>
    %284 = vector.extract_strided_slice %280 {offsets = [0, 64], sizes = [2, 32], strides = [1, 1]} : vector<2x128xf32> to vector<2x32xf32>
    %285 = arith.mulf %282, %269 : vector<2x32xf32>
    %286 = arith.mulf %281, %284 : vector<2x32xf32>
    %287 = arith.addf %285, %286 : vector<2x32xf32>
    %288 = math.tanh %287 : vector<2x32xf32>
    %289 = arith.mulf %283, %288 : vector<2x32xf32>
    %290 = vector.extract_strided_slice %196 {offsets = [10, 0], sizes = [2, 128], strides = [1, 1]} : vector<16x128xf32> to vector<2x128xf32>
    %cst_59 = arith.constant dense<0.000000e+00> : vector<2x128xf32>
    %291 = tpu.matmul %289, %197, %cst_59 {dimension_numbers = #tpu.dot_dimension_numbers<[1], [0], [0], [1], [0, 0, 1, 1], [], []>} : vector<2x32xf32>, vector<32x128xf32>, vector<2x128xf32> -> vector<2x128xf32>
    %292 = arith.addf %290, %291 : vector<2x128xf32>
    %293 = arith.negf %292 : vector<2x128xf32>
    %294 = math.exp %293 : vector<2x128xf32>
    %cst_60 = arith.constant 1.000000e+00 : f32
    %295 = vector.broadcast %cst_60 : f32 to vector<2x128xf32>
    %296 = arith.addf %295, %294 : vector<2x128xf32>
    %297 = arith.divf %295, %296 : vector<2x128xf32>
    %298 = math.tanh %292 : vector<2x128xf32>
    %299 = vector.extract_strided_slice %297 {offsets = [0, 0], sizes = [2, 32], strides = [1, 1]} : vector<2x128xf32> to vector<2x32xf32>
    %300 = vector.extract_strided_slice %297 {offsets = [0, 32], sizes = [2, 32], strides = [1, 1]} : vector<2x128xf32> to vector<2x32xf32>
    %301 = vector.extract_strided_slice %297 {offsets = [0, 96], sizes = [2, 32], strides = [1, 1]} : vector<2x128xf32> to vector<2x32xf32>
    %302 = vector.extract_strided_slice %298 {offsets = [0, 64], sizes = [2, 32], strides = [1, 1]} : vector<2x128xf32> to vector<2x32xf32>
    %303 = arith.mulf %300, %287 : vector<2x32xf32>
    %304 = arith.mulf %299, %302 : vector<2x32xf32>
    %305 = arith.addf %303, %304 : vector<2x32xf32>
    %306 = math.tanh %305 : vector<2x32xf32>
    %307 = arith.mulf %301, %306 : vector<2x32xf32>
    %308 = vector.extract_strided_slice %196 {offsets = [12, 0], sizes = [2, 128], strides = [1, 1]} : vector<16x128xf32> to vector<2x128xf32>
    %cst_61 = arith.constant dense<0.000000e+00> : vector<2x128xf32>
    %309 = tpu.matmul %307, %197, %cst_61 {dimension_numbers = #tpu.dot_dimension_numbers<[1], [0], [0], [1], [0, 0, 1, 1], [], []>} : vector<2x32xf32>, vector<32x128xf32>, vector<2x128xf32> -> vector<2x128xf32>
    %310 = arith.addf %308, %309 : vector<2x128xf32>
    %311 = arith.negf %310 : vector<2x128xf32>
    %312 = math.exp %311 : vector<2x128xf32>
    %cst_62 = arith.constant 1.000000e+00 : f32
    %313 = vector.broadcast %cst_62 : f32 to vector<2x128xf32>
    %314 = arith.addf %313, %312 : vector<2x128xf32>
    %315 = arith.divf %313, %314 : vector<2x128xf32>
    %316 = math.tanh %310 : vector<2x128xf32>
    %317 = vector.extract_strided_slice %315 {offsets = [0, 0], sizes = [2, 32], strides = [1, 1]} : vector<2x128xf32> to vector<2x32xf32>
    %318 = vector.extract_strided_slice %315 {offsets = [0, 32], sizes = [2, 32], strides = [1, 1]} : vector<2x128xf32> to vector<2x32xf32>
    %319 = vector.extract_strided_slice %315 {offsets = [0, 96], sizes = [2, 32], strides = [1, 1]} : vector<2x128xf32> to vector<2x32xf32>
    %320 = vector.extract_strided_slice %316 {offsets = [0, 64], sizes = [2, 32], strides = [1, 1]} : vector<2x128xf32> to vector<2x32xf32>
    %321 = arith.mulf %318, %305 : vector<2x32xf32>
    %322 = arith.mulf %317, %320 : vector<2x32xf32>
    %323 = arith.addf %321, %322 : vector<2x32xf32>
    %324 = math.tanh %323 : vector<2x32xf32>
    %325 = arith.mulf %319, %324 : vector<2x32xf32>
    %326 = vector.extract_strided_slice %196 {offsets = [14, 0], sizes = [2, 128], strides = [1, 1]} : vector<16x128xf32> to vector<2x128xf32>
    %cst_63 = arith.constant dense<0.000000e+00> : vector<2x128xf32>
    %327 = tpu.matmul %325, %197, %cst_63 {dimension_numbers = #tpu.dot_dimension_numbers<[1], [0], [0], [1], [0, 0, 1, 1], [], []>} : vector<2x32xf32>, vector<32x128xf32>, vector<2x128xf32> -> vector<2x128xf32>
    %328 = arith.addf %326, %327 : vector<2x128xf32>
    %329 = arith.negf %328 : vector<2x128xf32>
    %330 = math.exp %329 : vector<2x128xf32>
    %cst_64 = arith.constant 1.000000e+00 : f32
    %331 = vector.broadcast %cst_64 : f32 to vector<2x128xf32>
    %332 = arith.addf %331, %330 : vector<2x128xf32>
    %333 = arith.divf %331, %332 : vector<2x128xf32>
    %334 = math.tanh %328 : vector<2x128xf32>
    %335 = vector.extract_strided_slice %333 {offsets = [0, 0], sizes = [2, 32], strides = [1, 1]} : vector<2x128xf32> to vector<2x32xf32>
    %336 = vector.extract_strided_slice %333 {offsets = [0, 32], sizes = [2, 32], strides = [1, 1]} : vector<2x128xf32> to vector<2x32xf32>
    %337 = vector.extract_strided_slice %333 {offsets = [0, 96], sizes = [2, 32], strides = [1, 1]} : vector<2x128xf32> to vector<2x32xf32>
    %338 = vector.extract_strided_slice %334 {offsets = [0, 64], sizes = [2, 32], strides = [1, 1]} : vector<2x128xf32> to vector<2x32xf32>
    %339 = arith.mulf %336, %323 : vector<2x32xf32>
    %340 = arith.mulf %335, %338 : vector<2x32xf32>
    %341 = arith.addf %339, %340 : vector<2x32xf32>
    %342 = math.tanh %341 : vector<2x32xf32>
    %343 = arith.mulf %337, %342 : vector<2x32xf32>
    %c0_65 = arith.constant 0 : index
    %c0_66 = arith.constant 0 : index
    %344 = vector.load %arg12[%c0_65, %c0_66] : memref<32x3xf32, #tpu.memory_space<vmem>>, vector<32x3xf32>
    %cst_67 = arith.constant dense<0.000000e+00> : vector<2x3xf32>
    %345 = tpu.matmul %343, %344, %cst_67 {dimension_numbers = #tpu.dot_dimension_numbers<[1], [0], [0], [1], [0, 0, 1, 1], [], []>} : vector<2x32xf32>, vector<32x3xf32>, vector<2x3xf32> -> vector<2x3xf32>
    %c0_68 = arith.constant 0 : index
    %c0_69 = arith.constant 0 : index
    %346 = vector.load %arg13[%c0_68, %c0_69] : memref<1x3xf32, #tpu.memory_space<vmem>>, vector<1x3xf32>
    %347 = vector.broadcast %346 : vector<1x3xf32> to vector<2x3xf32>
    %348 = arith.addf %345, %347 : vector<2x3xf32>
    %c0_70 = arith.constant 0 : index
    %c0_71 = arith.constant 0 : index
    %349 = vector.load %arg14[%c0_70, %c0_71] : memref<2x3xf32, #tpu.memory_space<vmem>>, vector<2x3xf32>
    tpu.vector_store %arg14[%c0_70, %c0_71], %348 {strides = array<i32>} : memref<2x3xf32, #tpu.memory_space<vmem>>, vector<2x3xf32>,
    return
  }
  func.func @transform_0(%arg0: i32) -> (i32, i32, i32) {
    %c0_i32 = arith.constant 0 : i32
    %c0_i32_0 = arith.constant 0 : i32
    %c0_i32_1 = arith.constant 0 : i32
    %c0_i32_2 = arith.constant 0 : i32
    return %c0_i32, %c0_i32_0, %c0_i32_1 : i32, i32, i32
  }
  func.func @transform_1(%arg0: i32) -> (i32, i32) {
    %c0_i32 = arith.constant 0 : i32
    %c0_i32_0 = arith.constant 0 : i32
    %c0_i32_1 = arith.constant 0 : i32
    return %c0_i32, %c0_i32_0 : i32, i32
  }
  func.func @transform_2(%arg0: i32) -> (i32, i32) {
    %c0_i32 = arith.constant 0 : i32
    %c0_i32_0 = arith.constant 0 : i32
    %c0_i32_1 = arith.constant 0 : i32
    return %c0_i32, %c0_i32_0 : i32, i32
  }
  func.func @transform_3(%arg0: i32) -> (i32, i32) {
    %c0_i32 = arith.constant 0 : i32
    %c0_i32_0 = arith.constant 0 : i32
    %c0_i32_1 = arith.constant 0 : i32
    return %c0_i32, %c0_i32_0 : i32, i32
  }
  func.func @transform_4(%arg0: i32) -> (i32, i32) {
    %c0_i32 = arith.constant 0 : i32
    %c0_i32_0 = arith.constant 0 : i32
    %c0_i32_1 = arith.constant 0 : i32
    return %c0_i32, %c0_i32_0 : i32, i32
  }
  func.func @transform_5(%arg0: i32) -> (i32, i32) {
    %c0_i32 = arith.constant 0 : i32
    %c0_i32_0 = arith.constant 0 : i32
    %c0_i32_1 = arith.constant 0 : i32
    return %c0_i32, %c0_i32_0 : i32, i32
  }
  func.func @transform_6(%arg0: i32) -> (i32, i32) {
    %c0_i32 = arith.constant 0 : i32
    %c0_i32_0 = arith.constant 0 : i32
    %c0_i32_1 = arith.constant 0 : i32
    return %c0_i32, %c0_i32_0 : i32, i32
  }
  func.func @transform_7(%arg0: i32) -> (i32, i32) {
    %c0_i32 = arith.constant 0 : i32
    %c0_i32_0 = arith.constant 0 : i32
    %c0_i32_1 = arith.constant 0 : i32
    return %c0_i32, %c0_i32_0 : i32, i32
  }
  func.func @transform_8(%arg0: i32) -> (i32, i32) {
    %c0_i32 = arith.constant 0 : i32
    %c0_i32_0 = arith.constant 0 : i32
    %c0_i32_1 = arith.constant 0 : i32
    return %c0_i32, %c0_i32_0 : i32, i32
  }
  func.func @transform_9(%arg0: i32) -> (i32, i32) {
    %c0_i32 = arith.constant 0 : i32
    %c0_i32_0 = arith.constant 0 : i32
    %c0_i32_1 = arith.constant 0 : i32
    return %c0_i32, %c0_i32_0 : i32, i32
  }
  func.func @transform_10(%arg0: i32) -> (i32, i32) {
    %c0_i32 = arith.constant 0 : i32
    %c0_i32_0 = arith.constant 0 : i32
    %c0_i32_1 = arith.constant 0 : i32
    return %c0_i32, %c0_i32_0 : i32, i32
  }
  func.func @transform_11(%arg0: i32) -> (i32, i32) {
    %c0_i32 = arith.constant 0 : i32
    %c0_i32_0 = arith.constant 0 : i32
    %c0_i32_1 = arith.constant 0 : i32
    return %c0_i32, %c0_i32_0 : i32, i32
  }
  func.func @transform_12(%arg0: i32) -> (i32, i32) {
    %c0_i32 = arith.constant 0 : i32
    %c0_i32_0 = arith.constant 0 : i32
    %c0_i32_1 = arith.constant 0 : i32
    return %c0_i32, %c0_i32_0 : i32, i32
  }
  func.func @transform_13(%arg0: i32) -> (i32, i32) {
    %c0_i32 = arith.constant 0 : i32
    %c0_i32_0 = arith.constant 0 : i32
    %c0_i32_1 = arith.constant 0 : i32
    return %c0_i32, %c0_i32_0 : i32, i32
  }
}

</mosaic_0001>

<llo_original>
// kernel: cnn_lstm_forward.1
$region0: #{cnn_lstm_forward.1}
  #allocation0 [shape = 'u32[]', space=smem, size = 0x4, offset = 0x4, fixed_abs, tag = 'smem constant byte address 0x4 - core index']
  #allocation1 [shape = 'u32[144,128]{1,0:T(1,128)}', space=vmem, size = 0x12000, scoped, tag = 'internal scratch']
  %s0 = inlined_call_operand.vmem [shape: f32[8,2,4], index: 0, kind: input, shape index: {}]
  %s1 = inlined_call_operand.vmem [shape: f32[12,16], index: 1, kind: input, shape index: {}]
  %s2 = inlined_call_operand.vmem [shape: f32[1,16], index: 2, kind: input, shape index: {}]
  %s3 = inlined_call_operand.vmem [shape: f32[48,16], index: 3, kind: input, shape index: {}]
  %s4 = inlined_call_operand.vmem [shape: f32[1,16], index: 4, kind: input, shape index: {}]
  %s5 = inlined_call_operand.vmem [shape: f32[16,128], index: 5, kind: input, shape index: {}]
  %s6 = inlined_call_operand.vmem [shape: f32[32,128], index: 6, kind: input, shape index: {}]
  %s7 = inlined_call_operand.vmem [shape: f32[1,128], index: 7, kind: input, shape index: {}]
  %s8 = inlined_call_operand.vmem [shape: f32[32,128], index: 8, kind: input, shape index: {}]
  %s9 = inlined_call_operand.vmem [shape: f32[32,128], index: 9, kind: input, shape index: {}]
  %s10 = inlined_call_operand.vmem [shape: f32[1,128], index: 10, kind: input, shape index: {}]
  %s11 = inlined_call_operand.vmem [shape: f32[32,3], index: 11, kind: input, shape index: {}]
  %s12 = inlined_call_operand.vmem [shape: f32[1,3], index: 12, kind: input, shape index: {}]
  %s13 = inlined_call_operand.hbm [shape: f32[2,3], index: 13, kind: output, shape index: {}]
  %s14 = sld [smem:[#allocation0]]
  $region62: #{cnn_lstm_forward.1} parent=0
    _
  %s16 = ssub.s32 1, %s14
  %s17 = scalar_select 0, %s16, %s14
  $region1: #{cnn_lstm_forward.1} parent=0
    #allocation2 [shape = 'u8[1024]{0}', space=vmem, size = 0x400, scoped, tag = 'output window, operand 0, single buffered']
    #allocation3 [shape = 's32[1]{0}', space=sflag, size = 0x4, scoped, tag = 'scoped memory for cnn_lstm_forward.1']
    %18 = vsyncpa [#allocation3], 0
    // Predicated region
    $region2: #{cnn_lstm_forward.1} parent=1 // pred_check
      _
    $region3: #{cnn_lstm_forward.1} parent=1 // pred_check_branch
      %20 = sbr.rel (0) target = $region5
    $region4: #{cnn_lstm_forward.1} parent=1 // pred_region
      _
    $region5: #{cnn_lstm_forward.1} parent=1 // pred_fallthru
      _
    // Predicated region
    $region6: #{cnn_lstm_forward.1} parent=1 // pred_check
      _
    $region7: #{cnn_lstm_forward.1} parent=1 // pred_check_branch
      %22 = sbr.rel (0) target = $region9
    $region8: #{cnn_lstm_forward.1} parent=1 // pred_region
      _
    $region9: #{cnn_lstm_forward.1} parent=1 // pred_fallthru
      _
    // Predicated region
    $region10: #{cnn_lstm_forward.1} parent=1 // pred_check
      _
    $region11: #{cnn_lstm_forward.1} parent=1 // pred_check_branch
      %24 = sbr.rel (0) target = $region13
    $region12: #{cnn_lstm_forward.1} parent=1 // pred_region
      _
    $region13: #{cnn_lstm_forward.1} parent=1 // pred_fallthru
      _
    // Predicated region
    $region14: #{cnn_lstm_forward.1} parent=1 // pred_check
      _
    $region15: #{cnn_lstm_forward.1} parent=1 // pred_check_branch
      %26 = sbr.rel (0) target = $region17
    $region16: #{cnn_lstm_forward.1} parent=1 // pred_region
      _
    $region17: #{cnn_lstm_forward.1} parent=1 // pred_fallthru
      _
    // Predicated region
    $region18: #{cnn_lstm_forward.1} parent=1 // pred_check
      _
    $region19: #{cnn_lstm_forward.1} parent=1 // pred_check_branch
      %28 = sbr.rel (0) target = $region21
    $region20: #{cnn_lstm_forward.1} parent=1 // pred_region
      _
    $region21: #{cnn_lstm_forward.1} parent=1 // pred_fallthru
      _
    // Predicated region
    $region22: #{cnn_lstm_forward.1} parent=1 // pred_check
      _
    $region23: #{cnn_lstm_forward.1} parent=1 // pred_check_branch
      %30 = sbr.rel (0) target = $region25
    $region24: #{cnn_lstm_forward.1} parent=1 // pred_region
      _
    $region25: #{cnn_lstm_forward.1} parent=1 // pred_fallthru
      _
    // Predicated region
    $region26: #{cnn_lstm_forward.1} parent=1 // pred_check
      _
    $region27: #{cnn_lstm_forward.1} parent=1 // pred_check_branch
      %32 = sbr.rel (0) target = $region29
    $region28: #{cnn_lstm_forward.1} parent=1 // pred_region
      _
    $region29: #{cnn_lstm_forward.1} parent=1 // pred_fallthru
      _
    // Predicated region
    $region30: #{cnn_lstm_forward.1} parent=1 // pred_check
      _
    $region31: #{cnn_lstm_forward.1} parent=1 // pred_check_branch
      %34 = sbr.rel (0) target = $region33
    $region32: #{cnn_lstm_forward.1} parent=1 // pred_region
      _
    $region33: #{cnn_lstm_forward.1} parent=1 // pred_fallthru
      _
    // Predicated region
    $region34: #{cnn_lstm_forward.1} parent=1 // pred_check
      _
    $region35: #{cnn_lstm_forward.1} parent=1 // pred_check_branch
      %36 = sbr.rel (0) target = $region37
    $region36: #{cnn_lstm_forward.1} parent=1 // pred_region
      _
    $region37: #{cnn_lstm_forward.1} parent=1 // pred_fallthru
      _
    // Predicated region
    $region38: #{cnn_lstm_forward.1} parent=1 // pred_check
      _
    $region39: #{cnn_lstm_forward.1} parent=1 // pred_check_branch
      %38 = sbr.rel (0) target = $region41
    $region40: #{cnn_lstm_forward.1} parent=1 // pred_region
      _
    $region41: #{cnn_lstm_forward.1} parent=1 // pred_fallthru
      _
    // Predicated region
    $region42: #{cnn_lstm_forward.1} parent=1 // pred_check
      _
    $region43: #{cnn_lstm_forward.1} parent=1 // pred_check_branch
      %40 = sbr.rel (0) target = $region45
    $region44: #{cnn_lstm_forward.1} parent=1 // pred_region
      _
    $region45: #{cnn_lstm_forward.1} parent=1 // pred_fallthru
      _
    // Predicated region
    $region46: #{cnn_lstm_forward.1} parent=1 // pred_check
      _
    $region47: #{cnn_lstm_forward.1} parent=1 // pred_check_branch
      %42 = sbr.rel (0) target = $region49
    $region48: #{cnn_lstm_forward.1} parent=1 // pred_region
      _
    $region49: #{cnn_lstm_forward.1} parent=1 // pred_fallthru
      _
    // Predicated region
    $region50: #{cnn_lstm_forward.1} parent=1 // pred_check
      _
    $region51: #{cnn_lstm_forward.1} parent=1 // pred_check_branch
      %44 = sbr.rel (0) target = $region53
    $region52: #{cnn_lstm_forward.1} parent=1 // pred_region
      _
    $region53: #{cnn_lstm_forward.1} parent=1 // pred_fallthru
      _
    %v45 = vld [vmem:[%s0] sm:$0x3]
    %v46 = vld [vmem:[%s0 + $0x2] sm:$0x3]
    %v47 = vld [vmem:[%s0 + $0x4] sm:$0x3]
    %v48 = vld [vmem:[%s0 + $0x6] sm:$0x3]
    %v49 = vld [vmem:[%s0 + $0x8] sm:$0x3]
    %v50 = vld [vmem:[%s0 + $0xa] sm:$0x3]
    %v51 = vld [vmem:[%s0 + $0xc] sm:$0x3]
    %v52 = vld [vmem:[%s0 + $0xe] sm:$0x3]
    %61 = vrot.lane.b32.xlu0 %v45, 4
    %v62 = vpop.permute.xlu0 %61
    %63 = vrot.lane.b32.xlu0 %v46, 4
    %v64 = vpop.permute.xlu0 %63
    %65 = vrot.lane.b32.xlu0 %v47, 4
    %v66 = vpop.permute.xlu0 %65
    %67 = vrot.lane.b32.xlu0 %v48, 4
    %v68 = vpop.permute.xlu0 %67
    %69 = vrot.lane.b32.xlu0 %v49, 4
    %v70 = vpop.permute.xlu0 %69
    %71 = vrot.lane.b32.xlu0 %v50, 4
    %v72 = vpop.permute.xlu0 %71
    %73 = vrot.lane.b32.xlu0 %v51, 4
    %v74 = vpop.permute.xlu0 %73
    %75 = vrot.lane.b32.xlu0 %v52, 4
    %v76 = vpop.permute.xlu0 %75
    %86 = vrot.lane.b32.xlu0 %v46, 8
    %v87 = vpop.permute.xlu0 %86
    %88 = vrot.lane.b32.xlu0 %v47, 8
    %v89 = vpop.permute.xlu0 %88
    %90 = vrot.lane.b32.xlu0 %v48, 8
    %v91 = vpop.permute.xlu0 %90
    %92 = vrot.lane.b32.xlu0 %v49, 8
    %v93 = vpop.permute.xlu0 %92
    %94 = vrot.lane.b32.xlu0 %v50, 8
    %v95 = vpop.permute.xlu0 %94
    %96 = vrot.lane.b32.xlu0 %v51, 8
    %v97 = vpop.permute.xlu0 %96
    %98 = vrot.lane.b32.xlu0 %v52, 8
    %v99 = vpop.permute.xlu0 %98
    %100 = vrot.lane.b32.xlu0 0.0, 8
    %v101 = vpop.permute.xlu0 %100
    %vm110 = vcmask 31744
    %v111 = vsel %vm110, 0.0, %v62
    %v112 = vsel %vm110, %v45, %v64
    %v113 = vsel %vm110, %v46, %v66
    %v114 = vsel %vm110, %v47, %v68
    %v115 = vsel %vm110, %v48, %v70
    %v116 = vsel %vm110, %v49, %v72
    %v117 = vsel %vm110, %v50, %v74
    %v118 = vsel %vm110, %v51, %v76
    %vm119 = vcmask 64512
    %v120 = vsel %vm119, %v111, %v87
    %v121 = vsel %vm119, %v112, %v89
    %v122 = vsel %vm119, %v113, %v91
    %v123 = vsel %vm119, %v114, %v93
    %v124 = vsel %vm119, %v115, %v95
    %v125 = vsel %vm119, %v116, %v97
    %v126 = vsel %vm119, %v117, %v99
    %v127 = vsel %vm119, %v118, %v101
    %v128 = vld [vmem:[%s1] sm:$0xff]
    %v129 = vld [vmem:[%s1 + $0x8] sm:$0xf]
    %v130 = vld [vmem:[%s2] sm:$0x1]
    %v132 = vlaneseq
    %v133 = vshrl.u32 %v132, 7
    %v134 = vsub.s32 0, %v133
    %v135 = vrot.slane %v130, %v134
    %v145 = vcombine.low %v120, %v121
    %v146 = vcombine.low %v122, %v123
    %v148 = vunpack.c.l.s4 1983009808
    %v149 = vunpack.c.0.s8 %v148
    %v150 = vlaneseq
    %v151 = vshrl.u32 %v150, 7
    %v152 = vsub.s32 %v149, %v151
    %v153 = vrot.slane %v145, %v152
    %v155 = vunpack.c.l.s4 1983009808
    %v156 = vunpack.c.0.s8 %v155
    %v157 = vlaneseq
    %v158 = vshrl.u32 %v157, 7
    %v159 = vsub.s32 %v156, %v158
    %v160 = vrot.slane %v146, %v159
    %v161 = vcombine.low %v153, %v160
    %v162 = vcombine.low %v124, %v125
    %v163 = vcombine.low %v126, %v127
    %v165 = vunpack.c.l.s4 1983009808
    %v166 = vunpack.c.0.s8 %v165
    %v167 = vlaneseq
    %v168 = vshrl.u32 %v167, 7
    %v169 = vsub.s32 %v166, %v168
    %v170 = vrot.slane %v162, %v169
    %v172 = vunpack.c.l.s4 1983009808
    %v173 = vunpack.c.0.s8 %v172
    %v174 = vlaneseq
    %v175 = vshrl.u32 %v174, 7
    %v176 = vsub.s32 %v173, %v175
    %v177 = vrot.slane %v163, %v176
    %v178 = vcombine.low %v170, %v177
    %vm179 = vcmask 97280
    %v180 = vsel %vm179, %v161, 0
    %v182 = vsel %vm179, %v178, 0
    %vm184 = vcmask 1043456
    %v186 = vsel %vm184, %v129, 0
    %188 = vmatprep.subr.mxu0 0.0
    %189 = vmatpush1.msra.mxu0 %v128
    %190 = vmatprep.subr.mxu0 0.0
    %191 = vmatpush1.msra.mxu0 %v186
    %192 = vmatprep.subr.mxu0 0.0
    %193 = vmatpush1.msra.mxu0 0.0
    %194 = vmatprep.subr.mxu0 0.0
    %195 = vmatpush1.msra.mxu0 0.0
    %196 = vmatprep.subr.mxu0 0.0
    %197 = vmatpush1.msra.mxu0 0.0
    %198 = vmatprep.subr.mxu0 0.0
    %199 = vmatpush1.msra.mxu0 0.0
    %200 = vmatprep.subr.mxu0 0.0
    %201 = vmatpush1.msra.mxu0 0.0
    %202 = vmatprep.subr.mxu0 0.0
    %203 = vmatpush1.msra.mxu0 0.0
    %204 = vmatprep.subr.mxu0 0.0
    %205 = vmatpush1.msra.mxu0 0.0
    %206 = vmatprep.subr.mxu0 0.0
    %207 = vmatpush1.msra.mxu0 0.0
    %208 = vmatprep.subr.mxu0 0.0
    %209 = vmatpush1.msra.mxu0 0.0
    %210 = vmatprep.subr.mxu0 0.0
    %211 = vmatpush1.msra.mxu0 0.0
    %212 = vmatprep.subr.mxu0 0.0
    %213 = vmatpush1.msra.mxu0 0.0
    %214 = vmatprep.subr.mxu0 0.0
    %215 = vmatpush1.msra.mxu0 0.0
    %216 = vmatprep.subr.mxu0 0.0
    %217 = vmatpush1.msra.mxu0 0.0
    %218 = vmatprep.subr.mxu0 0.0
    %219 = vmatpush1.msra.mxu0 0.0
    %220 = vmatprep.subr.mxu0 0.0
    %221 = vmatpush1.msra.mxu0 0.0
    %222 = vmatprep.subr.mxu0 0.0
    %223 = vmatpush1.msra.mxu0 0.0
    %224 = vmatprep.subr.mxu0 0.0
    %225 = vmatpush1.msra.mxu0 0.0
    %226 = vmatprep.subr.mxu0 0.0
    %227 = vmatpush1.msra.mxu0 0.0
    %228 = vmatprep.subr.mxu0 0.0
    %229 = vmatpush1.msra.mxu0 0.0
    %230 = vmatprep.subr.mxu0 0.0
    %231 = vmatpush1.msra.mxu0 0.0
    %232 = vmatprep.subr.mxu0 0.0
    %233 = vmatpush1.msra.mxu0 0.0
    %234 = vmatprep.subr.mxu0 0.0
    %235 = vmatpush1.msra.mxu0 0.0
    %236 = vmatprep.subr.mxu0 0.0
    %237 = vmatpush1.msra.mxu0 0.0
    %238 = vmatprep.subr.mxu0 0.0
    %239 = vmatpush1.msra.mxu0 0.0
    %240 = vmatprep.subr.mxu0 0.0
    %241 = vmatpush1.msra.mxu0 0.0
    %242 = vmatprep.subr.mxu0 0.0
    %243 = vmatpush1.msra.mxu0 0.0
    %244 = vmatprep.subr.mxu0 0.0
    %245 = vmatpush1.msra.mxu0 0.0
    %246 = vmatprep.subr.mxu0 0.0
    %247 = vmatpush1.msra.mxu0 0.0
    %248 = vmatprep.subr.mxu0 0.0
    %249 = vmatpush1.msra.mxu0 0.0
    %250 = vmatprep.subr.mxu0 0.0
    %251 = vmatpush1.msra.mxu0 0.0
    %252 = vmatprep.mubr.f32.mxu0 0.0
    %253 = vmatmul.mubr.f32.gmra.mrb[0].mxu0 %v180
    %v254 = vpop.f32.mrb[0].mxu0
    %v255 = vadd.f32 %v135, %v254
    %v256 = vpop.f32.mrb[0].mxu0
    %257 = vmatprep.mubr.f32.mxu0 0.0
    %258 = vmatmul.mubr.f32.gmra.mrb[0].mxu0 %v182
    %v259 = vpop.f32.mrb[0].mxu0
    %v260 = vadd.f32 %v135, %v259
    %v261 = vpop.f32.mrb[0].mxu0
    %262 = vdwg.mxu0
    %v263 = vmax.f32 %v255, 0.0
    %v264 = vmax.f32 %v260, 0.0
    %v267 = vcombine.high %v263, %v263
    %v269 = vunpack.c.l.s4 1983009808
    %v270 = vunpack.c.0.s8 %v269
    %v271 = vlaneseq
    %v272 = vshrl.u32 %v271, 7
    %v273 = vsub.s32 %v270, %v272
    %v274 = vrot.slane %v263, %v273
    %v276 = vunpack.c.l.s4 1983009808
    %v277 = vunpack.c.0.s8 %v276
    %v278 = vlaneseq
    %v279 = vshrl.u32 %v278, 7
    %v280 = vsub.s32 %v277, %v279
    %v281 = vrot.slane %v267, %v280
    %v282 = vcombine.high %v274, %v274
    %v283 = vcombine.high %v281, %v281
    %v284 = vcombine.high %v264, %v264
    %v286 = vunpack.c.l.s4 1983009808
    %v287 = vunpack.c.0.s8 %v286
    %v288 = vlaneseq
    %v289 = vshrl.u32 %v288, 7
    %v290 = vsub.s32 %v287, %v289
    %v291 = vrot.slane %v264, %v290
    %v293 = vunpack.c.l.s4 1983009808
    %v294 = vunpack.c.0.s8 %v293
    %v295 = vlaneseq
    %v296 = vshrl.u32 %v295, 7
    %v297 = vsub.s32 %v294, %v296
    %v298 = vrot.slane %v284, %v297
    %v299 = vcombine.high %v291, %v291
    %v300 = vcombine.high %v298, %v298
    %308 = vrot.lane.b32.xlu0 %v274, 16
    %v309 = vpop.permute.xlu0 %308
    %310 = vrot.lane.b32.xlu0 %v282, 16
    %v311 = vpop.permute.xlu0 %310
    %312 = vrot.lane.b32.xlu0 %v281, 16
    %v313 = vpop.permute.xlu0 %312
    %314 = vrot.lane.b32.xlu0 %v283, 16
    %v315 = vpop.permute.xlu0 %314
    %316 = vrot.lane.b32.xlu0 %v291, 16
    %v317 = vpop.permute.xlu0 %316
    %318 = vrot.lane.b32.xlu0 %v299, 16
    %v319 = vpop.permute.xlu0 %318
    %320 = vrot.lane.b32.xlu0 %v298, 16
    %v321 = vpop.permute.xlu0 %320
    %322 = vrot.lane.b32.xlu0 %v300, 16
    %v323 = vpop.permute.xlu0 %322
    %332 = vrot.lane.b32.xlu0 %v282, 32
    %v333 = vpop.permute.xlu0 %332
    %334 = vrot.lane.b32.xlu0 %v281, 32
    %v335 = vpop.permute.xlu0 %334
    %336 = vrot.lane.b32.xlu0 %v283, 32
    %v337 = vpop.permute.xlu0 %336
    %338 = vrot.lane.b32.xlu0 %v291, 32
    %v339 = vpop.permute.xlu0 %338
    %340 = vrot.lane.b32.xlu0 %v299, 32
    %v341 = vpop.permute.xlu0 %340
    %342 = vrot.lane.b32.xlu0 %v298, 32
    %v343 = vpop.permute.xlu0 %342
    %344 = vrot.lane.b32.xlu0 %v300, 32
    %v345 = vpop.permute.xlu0 %344
    %346 = vrot.lane.b32.xlu0 0.0, 32
    %v347 = vpop.permute.xlu0 %346
    %vm356 = vcmask 130048
    %v357 = vsel %vm356, 0.0, %v309
    %v358 = vsel %vm356, %v274, %v311
    %v359 = vsel %vm356, %v282, %v313
    %v360 = vsel %vm356, %v281, %v315
    %v361 = vsel %vm356, %v283, %v317
    %v362 = vsel %vm356, %v291, %v319
    %v363 = vsel %vm356, %v299, %v321
    %v364 = vsel %vm356, %v298, %v323
    %vm365 = vcmask 261120
    %v366 = vsel %vm365, %v357, %v333
    %v367 = vsel %vm365, %v358, %v335
    %v368 = vsel %vm365, %v359, %v337
    %v369 = vsel %vm365, %v360, %v339
    %v370 = vsel %vm365, %v361, %v341
    %v371 = vsel %vm365, %v362, %v343
    %v372 = vsel %vm365, %v363, %v345
    %v373 = vsel %vm365, %v364, %v347
    %v374 = vld [vmem:[%s3] sm:$0xff]
    %v375 = vld [vmem:[%s3 + $0x8] sm:$0xff]
    %v376 = vld [vmem:[%s3 + $0x10] sm:$0xff]
    %v377 = vld [vmem:[%s3 + $0x18] sm:$0xff]
    %v378 = vld [vmem:[%s3 + $0x20] sm:$0xff]
    %v379 = vld [vmem:[%s3 + $0x28] sm:$0xff]
    %v380 = vld [vmem:[%s4] sm:$0x1]
    %v382 = vlaneseq
    %v383 = vshrl.u32 %v382, 7
    %v384 = vsub.s32 0, %v383
    %v385 = vrot.slane %v380, %v384
    %v395 = vcombine.low %v366, %v367
    %v396 = vcombine.low %v368, %v369
    %v398 = vunpack.c.l.s4 1983009808
    %v399 = vunpack.c.0.s8 %v398
    %v400 = vlaneseq
    %v401 = vshrl.u32 %v400, 7
    %v402 = vsub.s32 %v399, %v401
    %v403 = vrot.slane %v395, %v402
    %v405 = vunpack.c.l.s4 1983009808
    %v406 = vunpack.c.0.s8 %v405
    %v407 = vlaneseq
    %v408 = vshrl.u32 %v407, 7
    %v409 = vsub.s32 %v406, %v408
    %v410 = vrot.slane %v396, %v409
    %v411 = vcombine.low %v403, %v410
    %v412 = vcombine.low %v370, %v371
    %v413 = vcombine.low %v372, %v373
    %v415 = vunpack.c.l.s4 1983009808
    %v416 = vunpack.c.0.s8 %v415
    %v417 = vlaneseq
    %v418 = vshrl.u32 %v417, 7
    %v419 = vsub.s32 %v416, %v418
    %v420 = vrot.slane %v412, %v419
    %v422 = vunpack.c.l.s4 1983009808
    %v423 = vunpack.c.0.s8 %v422
    %v424 = vlaneseq
    %v425 = vshrl.u32 %v424, 7
    %v426 = vsub.s32 %v423, %v425
    %v427 = vrot.slane %v413, %v426
    %v428 = vcombine.low %v420, %v427
    %vm429 = vcmask 392192
    %v430 = vsel %vm429, %v411, 0
    %v432 = vsel %vm429, %v428, 0
    %434 = vmatprep.subr.mxu0 0.0
    %435 = vmatpush1.msra.mxu0 %v374
    %436 = vmatprep.subr.mxu0 0.0
    %437 = vmatpush1.msra.mxu0 %v375
    %438 = vmatprep.subr.mxu0 0.0
    %439 = vmatpush1.msra.mxu0 %v376
    %440 = vmatprep.subr.mxu0 0.0
    %441 = vmatpush1.msra.mxu0 %v377
    %442 = vmatprep.subr.mxu0 0.0
    %443 = vmatpush1.msra.mxu0 %v378
    %444 = vmatprep.subr.mxu0 0.0
    %445 = vmatpush1.msra.mxu0 %v379
    %446 = vmatprep.subr.mxu0 0.0
    %447 = vmatpush1.msra.mxu0 0.0
    %448 = vmatprep.subr.mxu0 0.0
    %449 = vmatpush1.msra.mxu0 0.0
    %450 = vmatprep.subr.mxu0 0.0
    %451 = vmatpush1.msra.mxu0 0.0
    %452 = vmatprep.subr.mxu0 0.0
    %453 = vmatpush1.msra.mxu0 0.0
    %454 = vmatprep.subr.mxu0 0.0
    %455 = vmatpush1.msra.mxu0 0.0
    %456 = vmatprep.subr.mxu0 0.0
    %457 = vmatpush1.msra.mxu0 0.0
    %458 = vmatprep.subr.mxu0 0.0
    %459 = vmatpush1.msra.mxu0 0.0
    %460 = vmatprep.subr.mxu0 0.0
    %461 = vmatpush1.msra.mxu0 0.0
    %462 = vmatprep.subr.mxu0 0.0
    %463 = vmatpush1.msra.mxu0 0.0
    %464 = vmatprep.subr.mxu0 0.0
    %465 = vmatpush1.msra.mxu0 0.0
    %466 = vmatprep.subr.mxu0 0.0
    %467 = vmatpush1.msra.mxu0 0.0
    %468 = vmatprep.subr.mxu0 0.0
    %469 = vmatpush1.msra.mxu0 0.0
    %470 = vmatprep.subr.mxu0 0.0
    %471 = vmatpush1.msra.mxu0 0.0
    %472 = vmatprep.subr.mxu0 0.0
    %473 = vmatpush1.msra.mxu0 0.0
    %474 = vmatprep.subr.mxu0 0.0
    %475 = vmatpush1.msra.mxu0 0.0
    %476 = vmatprep.subr.mxu0 0.0
    %477 = vmatpush1.msra.mxu0 0.0
    %478 = vmatprep.subr.mxu0 0.0
    %479 = vmatpush1.msra.mxu0 0.0
    %480 = vmatprep.subr.mxu0 0.0
    %481 = vmatpush1.msra.mxu0 0.0
    %482 = vmatprep.subr.mxu0 0.0
    %483 = vmatpush1.msra.mxu0 0.0
    %484 = vmatprep.subr.mxu0 0.0
    %485 = vmatpush1.msra.mxu0 0.0
    %486 = vmatprep.subr.mxu0 0.0
    %487 = vmatpush1.msra.mxu0 0.0
    %488 = vmatprep.subr.mxu0 0.0
    %489 = vmatpush1.msra.mxu0 0.0
    %490 = vmatprep.subr.mxu0 0.0
    %491 = vmatpush1.msra.mxu0 0.0
    %492 = vmatprep.subr.mxu0 0.0
    %493 = vmatpush1.msra.mxu0 0.0
    %494 = vmatprep.subr.mxu0 0.0
    %495 = vmatpush1.msra.mxu0 0.0
    %496 = vmatprep.subr.mxu0 0.0
    %497 = vmatpush1.msra.mxu0 0.0
    %498 = vmatprep.mubr.f32.mxu0 0.0
    %499 = vmatmul.mubr.f32.gmra.mrb[0].mxu0 %v430
    %v500 = vpop.f32.mrb[0].mxu0
    %v501 = vadd.f32 %v385, %v500
    %v502 = vpop.f32.mrb[0].mxu0
    %503 = vmatprep.mubr.f32.mxu0 0.0
    %504 = vmatmul.mubr.f32.gmra.mrb[0].mxu0 %v432
    %v505 = vpop.f32.mrb[0].mxu0
    %v506 = vadd.f32 %v385, %v505
    %v507 = vpop.f32.mrb[0].mxu0
    %508 = vdwg.mxu0
    %v509 = vmax.f32 %v501, 0.0
    %v510 = vmax.f32 %v506, 0.0
    %v511 = vld [vmem:[%s5] sm:$0xff]
    %v512 = vld [vmem:[%s5 + $0x8] sm:$0xff]
    %v513 = vld [vmem:[%s7] sm:$0x1]
    %v515 = vlaneseq
    %v516 = vshrl.u32 %v515, 7
    %v517 = vsub.s32 0, %v516
    %v518 = vrot.slane %v513, %v517
    %v521 = vsel %vm356, %v509, 0
    %v524 = vsel %vm356, %v510, 0
    %526 = vmatprep.subr.mxu0 0.0
    %527 = vmatpush1.msra.mxu0 %v511
    %528 = vmatprep.subr.mxu0 0.0
    %529 = vmatpush1.msra.mxu0 %v512
    %530 = vmatprep.subr.mxu0 0.0
    %531 = vmatpush1.msra.mxu0 0.0
    %532 = vmatprep.subr.mxu0 0.0
    %533 = vmatpush1.msra.mxu0 0.0
    %534 = vmatprep.subr.mxu0 0.0
    %535 = vmatpush1.msra.mxu0 0.0
    %536 = vmatprep.subr.mxu0 0.0
    %537 = vmatpush1.msra.mxu0 0.0
    %538 = vmatprep.subr.mxu0 0.0
    %539 = vmatpush1.msra.mxu0 0.0
    %540 = vmatprep.subr.mxu0 0.0
    %541 = vmatpush1.msra.mxu0 0.0
    %542 = vmatprep.subr.mxu0 0.0
    %543 = vmatpush1.msra.mxu0 0.0
    %544 = vmatprep.subr.mxu0 0.0
    %545 = vmatpush1.msra.mxu0 0.0
    %546 = vmatprep.subr.mxu0 0.0
    %547 = vmatpush1.msra.mxu0 0.0
    %548 = vmatprep.subr.mxu0 0.0
    %549 = vmatpush1.msra.mxu0 0.0
    %550 = vmatprep.subr.mxu0 0.0
    %551 = vmatpush1.msra.mxu0 0.0
    %552 = vmatprep.subr.mxu0 0.0
    %553 = vmatpush1.msra.mxu0 0.0
    %554 = vmatprep.subr.mxu0 0.0
    %555 = vmatpush1.msra.mxu0 0.0
    %556 = vmatprep.subr.mxu0 0.0
    %557 = vmatpush1.msra.mxu0 0.0
    %558 = vmatprep.subr.mxu0 0.0
    %559 = vmatpush1.msra.mxu0 0.0
    %560 = vmatprep.subr.mxu0 0.0
    %561 = vmatpush1.msra.mxu0 0.0
    %562 = vmatprep.subr.mxu0 0.0
    %563 = vmatpush1.msra.mxu0 0.0
    %564 = vmatprep.subr.mxu0 0.0
    %565 = vmatpush1.msra.mxu0 0.0
    %566 = vmatprep.subr.mxu0 0.0
    %567 = vmatpush1.msra.mxu0 0.0
    %568 = vmatprep.subr.mxu0 0.0
    %569 = vmatpush1.msra.mxu0 0.0
    %570 = vmatprep.subr.mxu0 0.0
    %571 = vmatpush1.msra.mxu0 0.0
    %572 = vmatprep.subr.mxu0 0.0
    %573 = vmatpush1.msra.mxu0 0.0
    %574 = vmatprep.subr.mxu0 0.0
    %575 = vmatpush1.msra.mxu0 0.0
    %576 = vmatprep.subr.mxu0 0.0
    %577 = vmatpush1.msra.mxu0 0.0
    %578 = vmatprep.subr.mxu0 0.0
    %579 = vmatpush1.msra.mxu0 0.0
    %580 = vmatprep.subr.mxu0 0.0
    %581 = vmatpush1.msra.mxu0 0.0
    %582 = vmatprep.subr.mxu0 0.0
    %583 = vmatpush1.msra.mxu0 0.0
    %584 = vmatprep.subr.mxu0 0.0
    %585 = vmatpush1.msra.mxu0 0.0
    %586 = vmatprep.subr.mxu0 0.0
    %587 = vmatpush1.msra.mxu0 0.0
    %588 = vmatprep.subr.mxu0 0.0
    %589 = vmatpush1.msra.mxu0 0.0
    %590 = vmatprep.mubr.f32.mxu0 0.0
    %591 = vmatmul.mubr.f32.gmra.mrb[0].mxu0 %v521
    %v592 = vpop.f32.mrb[0].mxu0
    %v593 = vadd.f32 %v518, %v592
    %v594 = vpop.f32.mrb[0].mxu0
    %595 = vmatprep.mubr.f32.mxu0 0.0
    %596 = vmatmul.mubr.f32.gmra.mrb[0].mxu0 %v524
    %v597 = vpop.f32.mrb[0].mxu0
    %v598 = vadd.f32 %v518, %v597
    %v599 = vpop.f32.mrb[0].mxu0
    %600 = vdwg.mxu0
    %v601 = vld [vmem:[%s6] sm:$0xff]
    %v602 = vld [vmem:[%s6 + $0x8] sm:$0xff]
    %v603 = vld [vmem:[%s6 + $0x10] sm:$0xff]
    %v604 = vld [vmem:[%s6 + $0x18] sm:$0xff]
    %v605 = vsel %vm365, 0.0, 0
    %607 = vmatprep.subr.mxu0 0.0
    %608 = vmatpush1.msra.mxu0 %v601
    %609 = vmatprep.subr.mxu0 0.0
    %610 = vmatpush1.msra.mxu0 %v602
    %611 = vmatprep.subr.mxu0 0.0
    %612 = vmatpush1.msra.mxu0 %v603
    %613 = vmatprep.subr.mxu0 0.0
    %614 = vmatpush1.msra.mxu0 %v604
    %615 = vmatprep.subr.mxu0 0.0
    %616 = vmatpush1.msra.mxu0 0.0
    %617 = vmatprep.subr.mxu0 0.0
    %618 = vmatpush1.msra.mxu0 0.0
    %619 = vmatprep.subr.mxu0 0.0
    %620 = vmatpush1.msra.mxu0 0.0
    %621 = vmatprep.subr.mxu0 0.0
    %622 = vmatpush1.msra.mxu0 0.0
    %623 = vmatprep.subr.mxu0 0.0
    %624 = vmatpush1.msra.mxu0 0.0
    %625 = vmatprep.subr.mxu0 0.0
    %626 = vmatpush1.msra.mxu0 0.0
    %627 = vmatprep.subr.mxu0 0.0
    %628 = vmatpush1.msra.mxu0 0.0
    %629 = vmatprep.subr.mxu0 0.0
    %630 = vmatpush1.msra.mxu0 0.0
    %631 = vmatprep.subr.mxu0 0.0
    %632 = vmatpush1.msra.mxu0 0.0
    %633 = vmatprep.subr.mxu0 0.0
    %634 = vmatpush1.msra.mxu0 0.0
    %635 = vmatprep.subr.mxu0 0.0
    %636 = vmatpush1.msra.mxu0 0.0
    %637 = vmatprep.subr.mxu0 0.0
    %638 = vmatpush1.msra.mxu0 0.0
    %639 = vmatprep.subr.mxu0 0.0
    %640 = vmatpush1.msra.mxu0 0.0
    %641 = vmatprep.subr.mxu0 0.0
    %642 = vmatpush1.msra.mxu0 0.0
    %643 = vmatprep.subr.mxu0 0.0
    %644 = vmatpush1.msra.mxu0 0.0
    %645 = vmatprep.subr.mxu0 0.0
    %646 = vmatpush1.msra.mxu0 0.0
    %647 = vmatprep.subr.mxu0 0.0
    %648 = vmatpush1.msra.mxu0 0.0
    %649 = vmatprep.subr.mxu0 0.0
    %650 = vmatpush1.msra.mxu0 0.0
    %651 = vmatprep.subr.mxu0 0.0
    %652 = vmatpush1.msra.mxu0 0.0
    %653 = vmatprep.subr.mxu0 0.0
    %654 = vmatpush1.msra.mxu0 0.0
    %655 = vmatprep.subr.mxu0 0.0
    %656 = vmatpush1.msra.mxu0 0.0
    %657 = vmatprep.subr.mxu0 0.0
    %658 = vmatpush1.msra.mxu0 0.0
    %659 = vmatprep.subr.mxu0 0.0
    %660 = vmatpush1.msra.mxu0 0.0
    %661 = vmatprep.subr.mxu0 0.0
    %662 = vmatpush1.msra.mxu0 0.0
    %663 = vmatprep.subr.mxu0 0.0
    %664 = vmatpush1.msra.mxu0 0.0
    %665 = vmatprep.subr.mxu0 0.0
    %666 = vmatpush1.msra.mxu0 0.0
    %667 = vmatprep.subr.mxu0 0.0
    %668 = vmatpush1.msra.mxu0 0.0
    %669 = vmatprep.subr.mxu0 0.0
    %670 = vmatpush1.msra.mxu0 0.0
    %671 = vmatprep.mubr.f32.mxu0 0.0
    %672 = vmatmul.mubr.f32.gmra.mrb[0].mxu0 %v605
    %v673 = vpop.f32.mrb[0].mxu0
    %v674 = vadd.f32 0.0, %v673
    %v675 = vpop.f32.mrb[0].mxu0
    %676 = vdwg.mxu0
    %v677 = vadd.f32 %v593, %v674
    %v678 = vxor.u32 %v677, 2147483648
    %v679 = vmul.f32 %v678, 1.442695
    %v680 = vpow.pop %v679
    %v681 = vadd.f32 %v680, 1.0
    %v682 = vrcp.pop %v681
    %v683 = vmul.f32 1.0, %v682
    %v684 = vtanh.pop %v677
    %v685 = vmul.f32 %v683, 0.0
    %687 = vrot.lane.b32.xlu0 %v684, 64
    %v688 = vpop.permute.xlu0 %687
    %v690 = vmul.f32 %v683, %v688
    %692 = vrot.lane.b32.xlu0 %v690, 32
    %v693 = vpop.permute.xlu0 %692
    %v695 = vadd.f32 %v685, %v693
    %v696 = vtanh.pop %v695
    %698 = vrot.lane.b32.xlu0 %v696, 64
    %v699 = vpop.permute.xlu0 %698
    %v701 = vmul.f32 %v683, %v699
    %703 = vrot.lane.b32.xlu0 %v701, 32
    %v704 = vpop.permute.xlu0 %703
    %v705 = vsel %vm365, %v704, 0
    %707 = vmatprep.subr.mxu0 0.0
    %708 = vmatpush1.msra.mxu0 %v601
    %709 = vmatprep.subr.mxu0 0.0
    %710 = vmatpush1.msra.mxu0 %v602
    %711 = vmatprep.subr.mxu0 0.0
    %712 = vmatpush1.msra.mxu0 %v603
    %713 = vmatprep.subr.mxu0 0.0
    %714 = vmatpush1.msra.mxu0 %v604
    %715 = vmatprep.subr.mxu0 0.0
    %716 = vmatpush1.msra.mxu0 0.0
    %717 = vmatprep.subr.mxu0 0.0
    %718 = vmatpush1.msra.mxu0 0.0
    %719 = vmatprep.subr.mxu0 0.0
    %720 = vmatpush1.msra.mxu0 0.0
    %721 = vmatprep.subr.mxu0 0.0
    %722 = vmatpush1.msra.mxu0 0.0
    %723 = vmatprep.subr.mxu0 0.0
    %724 = vmatpush1.msra.mxu0 0.0
    %725 = vmatprep.subr.mxu0 0.0
    %726 = vmatpush1.msra.mxu0 0.0
    %727 = vmatprep.subr.mxu0 0.0
    %728 = vmatpush1.msra.mxu0 0.0
    %729 = vmatprep.subr.mxu0 0.0
    %730 = vmatpush1.msra.mxu0 0.0
    %731 = vmatprep.subr.mxu0 0.0
    %732 = vmatpush1.msra.mxu0 0.0
    %733 = vmatprep.subr.mxu0 0.0
    %734 = vmatpush1.msra.mxu0 0.0
    %735 = vmatprep.subr.mxu0 0.0
    %736 = vmatpush1.msra.mxu0 0.0
    %737 = vmatprep.subr.mxu0 0.0
    %738 = vmatpush1.msra.mxu0 0.0
    %739 = vmatprep.subr.mxu0 0.0
    %740 = vmatpush1.msra.mxu0 0.0
    %741 = vmatprep.subr.mxu0 0.0
    %742 = vmatpush1.msra.mxu0 0.0
    %743 = vmatprep.subr.mxu0 0.0
    %744 = vmatpush1.msra.mxu0 0.0
    %745 = vmatprep.subr.mxu0 0.0
    %746 = vmatpush1.msra.mxu0 0.0
    %747 = vmatprep.subr.mxu0 0.0
    %748 = vmatpush1.msra.mxu0 0.0
    %749 = vmatprep.subr.mxu0 0.0
    %750 = vmatpush1.msra.mxu0 0.0
    %751 = vmatprep.subr.mxu0 0.0
    %752 = vmatpush1.msra.mxu0 0.0
    %753 = vmatprep.subr.mxu0 0.0
    %754 = vmatpush1.msra.mxu0 0.0
    %755 = vmatprep.subr.mxu0 0.0
    %756 = vmatpush1.msra.mxu0 0.0
    %757 = vmatprep.subr.mxu0 0.0
    %758 = vmatpush1.msra.mxu0 0.0
    %759 = vmatprep.subr.mxu0 0.0
    %760 = vmatpush1.msra.mxu0 0.0
    %761 = vmatprep.subr.mxu0 0.0
    %762 = vmatpush1.msra.mxu0 0.0
    %763 = vmatprep.subr.mxu0 0.0
    %764 = vmatpush1.msra.mxu0 0.0
    %765 = vmatprep.subr.mxu0 0.0
    %766 = vmatpush1.msra.mxu0 0.0
    %767 = vmatprep.subr.mxu0 0.0
    %768 = vmatpush1.msra.mxu0 0.0
    %769 = vmatprep.subr.mxu0 0.0
    %770 = vmatpush1.msra.mxu0 0.0
    %771 = vmatprep.mubr.f32.mxu0 0.0
    %772 = vmatmul.mubr.f32.gmra.mrb[0].mxu0 %v705
    %v773 = vpop.f32.mrb[0].mxu0
    %v774 = vadd.f32 0.0, %v773
    %v775 = vpop.f32.mrb[0].mxu0
    %776 = vdwg.mxu0
    %v778 = vrot.slane %v774, 6
    %v780 = vadd.f32 %v593, %v778
    %v781 = vxor.u32 %v780, 2147483648
    %v782 = vmul.f32 %v781, 1.442695
    %v783 = vpow.pop %v782
    %v784 = vadd.f32 %v783, 1.0
    %v785 = vrcp.pop %v784
    %v786 = vmul.f32 1.0, %v785
    %v787 = vtanh.pop %v780
    %v789 = vrot.slane %v695, 6
    %v791 = vmul.f32 %v786, %v789
    %793 = vrot.lane.b32.xlu0 %v787, 64
    %v794 = vpop.permute.xlu0 %793
    %v796 = vmul.f32 %v786, %v794
    %798 = vrot.lane.b32.xlu0 %v796, 32
    %v799 = vpop.permute.xlu0 %798
    %v801 = vadd.f32 %v791, %v799
    %v802 = vtanh.pop %v801
    %804 = vrot.lane.b32.xlu0 %v802, 64
    %v805 = vpop.permute.xlu0 %804
    %v807 = vmul.f32 %v786, %v805
    %v809 = vrot.slane %v807, 2
    %810 = vrot.lane.b32.xlu0 %v809, 32
    %v811 = vpop.permute.xlu0 %810
    %v812 = vsel %vm365, %v811, 0
    %814 = vmatprep.subr.mxu0 0.0
    %815 = vmatpush1.msra.mxu0 %v601
    %816 = vmatprep.subr.mxu0 0.0
    %817 = vmatpush1.msra.mxu0 %v602
    %818 = vmatprep.subr.mxu0 0.0
    %819 = vmatpush1.msra.mxu0 %v603
    %820 = vmatprep.subr.mxu0 0.0
    %821 = vmatpush1.msra.mxu0 %v604
    %822 = vmatprep.subr.mxu0 0.0
    %823 = vmatpush1.msra.mxu0 0.0
    %824 = vmatprep.subr.mxu0 0.0
    %825 = vmatpush1.msra.mxu0 0.0
    %826 = vmatprep.subr.mxu0 0.0
    %827 = vmatpush1.msra.mxu0 0.0
    %828 = vmatprep.subr.mxu0 0.0
    %829 = vmatpush1.msra.mxu0 0.0
    %830 = vmatprep.subr.mxu0 0.0
    %831 = vmatpush1.msra.mxu0 0.0
    %832 = vmatprep.subr.mxu0 0.0
    %833 = vmatpush1.msra.mxu0 0.0
    %834 = vmatprep.subr.mxu0 0.0
    %835 = vmatpush1.msra.mxu0 0.0
    %836 = vmatprep.subr.mxu0 0.0
    %837 = vmatpush1.msra.mxu0 0.0
    %838 = vmatprep.subr.mxu0 0.0
    %839 = vmatpush1.msra.mxu0 0.0
    %840 = vmatprep.subr.mxu0 0.0
    %841 = vmatpush1.msra.mxu0 0.0
    %842 = vmatprep.subr.mxu0 0.0
    %843 = vmatpush1.msra.mxu0 0.0
    %844 = vmatprep.subr.mxu0 0.0
    %845 = vmatpush1.msra.mxu0 0.0
    %846 = vmatprep.subr.mxu0 0.0
    %847 = vmatpush1.msra.mxu0 0.0
    %848 = vmatprep.subr.mxu0 0.0
    %849 = vmatpush1.msra.mxu0 0.0
    %850 = vmatprep.subr.mxu0 0.0
    %851 = vmatpush1.msra.mxu0 0.0
    %852 = vmatprep.subr.mxu0 0.0
    %853 = vmatpush1.msra.mxu0 0.0
    %854 = vmatprep.subr.mxu0 0.0
    %855 = vmatpush1.msra.mxu0 0.0
    %856 = vmatprep.subr.mxu0 0.0
    %857 = vmatpush1.msra.mxu0 0.0
    %858 = vmatprep.subr.mxu0 0.0
    %859 = vmatpush1.msra.mxu0 0.0
    %860 = vmatprep.subr.mxu0 0.0
    %861 = vmatpush1.msra.mxu0 0.0
    %862 = vmatprep.subr.mxu0 0.0
    %863 = vmatpush1.msra.mxu0 0.0
    %864 = vmatprep.subr.mxu0 0.0
    %865 = vmatpush1.msra.mxu0 0.0
    %866 = vmatprep.subr.mxu0 0.0
    %867 = vmatpush1.msra.mxu0 0.0
    %868 = vmatprep.subr.mxu0 0.0
    %869 = vmatpush1.msra.mxu0 0.0
    %870 = vmatprep.subr.mxu0 0.0
    %871 = vmatpush1.msra.mxu0 0.0
    %872 = vmatprep.subr.mxu0 0.0
    %873 = vmatpush1.msra.mxu0 0.0
    %874 = vmatprep.subr.mxu0 0.0
    %875 = vmatpush1.msra.mxu0 0.0
    %876 = vmatprep.subr.mxu0 0.0
    %877 = vmatpush1.msra.mxu0 0.0
    %878 = vmatprep.mubr.f32.mxu0 0.0
    %879 = vmatmul.mubr.f32.gmra.mrb[0].mxu0 %v812
    %v880 = vpop.f32.mrb[0].mxu0
    %v881 = vadd.f32 0.0, %v880
    %v882 = vpop.f32.mrb[0].mxu0
    %883 = vdwg.mxu0
    %v885 = vrot.slane %v881, 4
    %v887 = vadd.f32 %v593, %v885
    %v888 = vxor.u32 %v887, 2147483648
    %v889 = vmul.f32 %v888, 1.442695
    %v890 = vpow.pop %v889
    %v891 = vadd.f32 %v890, 1.0
    %v892 = vrcp.pop %v891
    %v893 = vmul.f32 1.0, %v892
    %v894 = vtanh.pop %v887
    %v896 = vrot.slane %v801, 6
    %v898 = vmul.f32 %v893, %v896
    %900 = vrot.lane.b32.xlu0 %v894, 64
    %v901 = vpop.permute.xlu0 %900
    %v903 = vmul.f32 %v893, %v901
    %905 = vrot.lane.b32.xlu0 %v903, 32
    %v906 = vpop.permute.xlu0 %905
    %v908 = vadd.f32 %v898, %v906
    %v909 = vtanh.pop %v908
    %911 = vrot.lane.b32.xlu0 %v909, 64
    %v912 = vpop.permute.xlu0 %911
    %v914 = vmul.f32 %v893, %v912
    %v916 = vrot.slane %v914, 4
    %917 = vrot.lane.b32.xlu0 %v916, 32
    %v918 = vpop.permute.xlu0 %917
    %v919 = vsel %vm365, %v918, 0
    %921 = vmatprep.subr.mxu0 0.0
    %922 = vmatpush1.msra.mxu0 %v601
    %923 = vmatprep.subr.mxu0 0.0
    %924 = vmatpush1.msra.mxu0 %v602
    %925 = vmatprep.subr.mxu0 0.0
    %926 = vmatpush1.msra.mxu0 %v603
    %927 = vmatprep.subr.mxu0 0.0
    %928 = vmatpush1.msra.mxu0 %v604
    %929 = vmatprep.subr.mxu0 0.0
    %930 = vmatpush1.msra.mxu0 0.0
    %931 = vmatprep.subr.mxu0 0.0
    %932 = vmatpush1.msra.mxu0 0.0
    %933 = vmatprep.subr.mxu0 0.0
    %934 = vmatpush1.msra.mxu0 0.0
    %935 = vmatprep.subr.mxu0 0.0
    %936 = vmatpush1.msra.mxu0 0.0
    %937 = vmatprep.subr.mxu0 0.0
    %938 = vmatpush1.msra.mxu0 0.0
    %939 = vmatprep.subr.mxu0 0.0
    %940 = vmatpush1.msra.mxu0 0.0
    %941 = vmatprep.subr.mxu0 0.0
    %942 = vmatpush1.msra.mxu0 0.0
    %943 = vmatprep.subr.mxu0 0.0
    %944 = vmatpush1.msra.mxu0 0.0
    %945 = vmatprep.subr.mxu0 0.0
    %946 = vmatpush1.msra.mxu0 0.0
    %947 = vmatprep.subr.mxu0 0.0
    %948 = vmatpush1.msra.mxu0 0.0
    %949 = vmatprep.subr.mxu0 0.0
    %950 = vmatpush1.msra.mxu0 0.0
    %951 = vmatprep.subr.mxu0 0.0
    %952 = vmatpush1.msra.mxu0 0.0
    %953 = vmatprep.subr.mxu0 0.0
    %954 = vmatpush1.msra.mxu0 0.0
    %955 = vmatprep.subr.mxu0 0.0
    %956 = vmatpush1.msra.mxu0 0.0
    %957 = vmatprep.subr.mxu0 0.0
    %958 = vmatpush1.msra.mxu0 0.0
    %959 = vmatprep.subr.mxu0 0.0
    %960 = vmatpush1.msra.mxu0 0.0
    %961 = vmatprep.subr.mxu0 0.0
    %962 = vmatpush1.msra.mxu0 0.0
    %963 = vmatprep.subr.mxu0 0.0
    %964 = vmatpush1.msra.mxu0 0.0
    %965 = vmatprep.subr.mxu0 0.0
    %966 = vmatpush1.msra.mxu0 0.0
    %967 = vmatprep.subr.mxu0 0.0
    %968 = vmatpush1.msra.mxu0 0.0
    %969 = vmatprep.subr.mxu0 0.0
    %970 = vmatpush1.msra.mxu0 0.0
    %971 = vmatprep.subr.mxu0 0.0
    %972 = vmatpush1.msra.mxu0 0.0
    %973 = vmatprep.subr.mxu0 0.0
    %974 = vmatpush1.msra.mxu0 0.0
    %975 = vmatprep.subr.mxu0 0.0
    %976 = vmatpush1.msra.mxu0 0.0
    %977 = vmatprep.subr.mxu0 0.0
    %978 = vmatpush1.msra.mxu0 0.0
    %979 = vmatprep.subr.mxu0 0.0
    %980 = vmatpush1.msra.mxu0 0.0
    %981 = vmatprep.subr.mxu0 0.0
    %982 = vmatpush1.msra.mxu0 0.0
    %983 = vmatprep.subr.mxu0 0.0
    %984 = vmatpush1.msra.mxu0 0.0
    %985 = vmatprep.mubr.f32.mxu0 0.0
    %986 = vmatmul.mubr.f32.gmra.mrb[0].mxu0 %v919
    %v987 = vpop.f32.mrb[0].mxu0
    %v988 = vadd.f32 0.0, %v987
    %v989 = vpop.f32.mrb[0].mxu0
    %990 = vdwg.mxu0
    %v992 = vrot.slane %v988, 2
    %v994 = vadd.f32 %v593, %v992
    %v995 = vxor.u32 %v994, 2147483648
    %v996 = vmul.f32 %v995, 1.442695
    %v997 = vpow.pop %v996
    %v998 = vadd.f32 %v997, 1.0
    %v999 = vrcp.pop %v998
    %v1000 = vmul.f32 1.0, %v999
    %v1001 = vtanh.pop %v994
    %v1003 = vrot.slane %v908, 6
    %v1005 = vmul.f32 %v1000, %v1003
    %1007 = vrot.lane.b32.xlu0 %v1001, 64
    %v1008 = vpop.permute.xlu0 %1007
    %v1010 = vmul.f32 %v1000, %v1008
    %1012 = vrot.lane.b32.xlu0 %v1010, 32
    %v1013 = vpop.permute.xlu0 %1012
    %v1015 = vadd.f32 %v1005, %v1013
    %v1016 = vtanh.pop %v1015
    %1018 = vrot.lane.b32.xlu0 %v1016, 64
    %v1019 = vpop.permute.xlu0 %1018
    %v1021 = vmul.f32 %v1000, %v1019
    %v1023 = vrot.slane %v1021, 6
    %1024 = vrot.lane.b32.xlu0 %v1023, 32
    %v1025 = vpop.permute.xlu0 %1024
    %v1026 = vsel %vm365, %v1025, 0
    %1028 = vmatprep.subr.mxu0 0.0
    %1029 = vmatpush1.msra.mxu0 %v601
    %1030 = vmatprep.subr.mxu0 0.0
    %1031 = vmatpush1.msra.mxu0 %v602
    %1032 = vmatprep.subr.mxu0 0.0
    %1033 = vmatpush1.msra.mxu0 %v603
    %1034 = vmatprep.subr.mxu0 0.0
    %1035 = vmatpush1.msra.mxu0 %v604
    %1036 = vmatprep.subr.mxu0 0.0
    %1037 = vmatpush1.msra.mxu0 0.0
    %1038 = vmatprep.subr.mxu0 0.0
    %1039 = vmatpush1.msra.mxu0 0.0
    %1040 = vmatprep.subr.mxu0 0.0
    %1041 = vmatpush1.msra.mxu0 0.0
    %1042 = vmatprep.subr.mxu0 0.0
    %1043 = vmatpush1.msra.mxu0 0.0
    %1044 = vmatprep.subr.mxu0 0.0
    %1045 = vmatpush1.msra.mxu0 0.0
    %1046 = vmatprep.subr.mxu0 0.0
    %1047 = vmatpush1.msra.mxu0 0.0
    %1048 = vmatprep.subr.mxu0 0.0
    %1049 = vmatpush1.msra.mxu0 0.0
    %1050 = vmatprep.subr.mxu0 0.0
    %1051 = vmatpush1.msra.mxu0 0.0
    %1052 = vmatprep.subr.mxu0 0.0
    %1053 = vmatpush1.msra.mxu0 0.0
    %1054 = vmatprep.subr.mxu0 0.0
    %1055 = vmatpush1.msra.mxu0 0.0
    %1056 = vmatprep.subr.mxu0 0.0
    %1057 = vmatpush1.msra.mxu0 0.0
    %1058 = vmatprep.subr.mxu0 0.0
    %1059 = vmatpush1.msra.mxu0 0.0
    %1060 = vmatprep.subr.mxu0 0.0
    %1061 = vmatpush1.msra.mxu0 0.0
    %1062 = vmatprep.subr.mxu0 0.0
    %1063 = vmatpush1.msra.mxu0 0.0
    %1064 = vmatprep.subr.mxu0 0.0
    %1065 = vmatpush1.msra.mxu0 0.0
    %1066 = vmatprep.subr.mxu0 0.0
    %1067 = vmatpush1.msra.mxu0 0.0
    %1068 = vmatprep.subr.mxu0 0.0
    %1069 = vmatpush1.msra.mxu0 0.0
    %1070 = vmatprep.subr.mxu0 0.0
    %1071 = vmatpush1.msra.mxu0 0.0
    %1072 = vmatprep.subr.mxu0 0.0
    %1073 = vmatpush1.msra.mxu0 0.0
    %1074 = vmatprep.subr.mxu0 0.0
    %1075 = vmatpush1.msra.mxu0 0.0
    %1076 = vmatprep.subr.mxu0 0.0
    %1077 = vmatpush1.msra.mxu0 0.0
    %1078 = vmatprep.subr.mxu0 0.0
    %1079 = vmatpush1.msra.mxu0 0.0
    %1080 = vmatprep.subr.mxu0 0.0
    %1081 = vmatpush1.msra.mxu0 0.0
    %1082 = vmatprep.subr.mxu0 0.0
    %1083 = vmatpush1.msra.mxu0 0.0
    %1084 = vmatprep.subr.mxu0 0.0
    %1085 = vmatpush1.msra.mxu0 0.0
    %1086 = vmatprep.subr.mxu0 0.0
    %1087 = vmatpush1.msra.mxu0 0.0
    %1088 = vmatprep.subr.mxu0 0.0
    %1089 = vmatpush1.msra.mxu0 0.0
    %1090 = vmatprep.subr.mxu0 0.0
    %1091 = vmatpush1.msra.mxu0 0.0
    %1092 = vmatprep.mubr.f32.mxu0 0.0
    %1093 = vmatmul.mubr.f32.gmra.mrb[0].mxu0 %v1026
    %v1094 = vpop.f32.mrb[0].mxu0
    %v1095 = vadd.f32 0.0, %v1094
    %v1096 = vpop.f32.mrb[0].mxu0
    %1097 = vdwg.mxu0
    %v1098 = vadd.f32 %v598, %v1095
    %v1099 = vxor.u32 %v1098, 2147483648
    %v1100 = vmul.f32 %v1099, 1.442695
    %v1101 = vpow.pop %v1100
    %v1102 = vadd.f32 %v1101, 1.0
    %v1103 = vrcp.pop %v1102
    %v1104 = vmul.f32 1.0, %v1103
    %v1105 = vtanh.pop %v1098
    %v1107 = vrot.slane %v1015, 6
    %v1109 = vmul.f32 %v1104, %v1107
    %1111 = vrot.lane.b32.xlu0 %v1105, 64
    %v1112 = vpop.permute.xlu0 %1111
    %v1114 = vmul.f32 %v1104, %v1112
    %1116 = vrot.lane.b32.xlu0 %v1114, 32
    %v1117 = vpop.permute.xlu0 %1116
    %v1119 = vadd.f32 %v1109, %v1117
    %v1120 = vtanh.pop %v1119
    %1122 = vrot.lane.b32.xlu0 %v1120, 64
    %v1123 = vpop.permute.xlu0 %1122
    %v1125 = vmul.f32 %v1104, %v1123
    %1127 = vrot.lane.b32.xlu0 %v1125, 32
    %v1128 = vpop.permute.xlu0 %1127
    %v1129 = vsel %vm365, %v1128, 0
    %1131 = vmatprep.subr.mxu0 0.0
    %1132 = vmatpush1.msra.mxu0 %v601
    %1133 = vmatprep.subr.mxu0 0.0
    %1134 = vmatpush1.msra.mxu0 %v602
    %1135 = vmatprep.subr.mxu0 0.0
    %1136 = vmatpush1.msra.mxu0 %v603
    %1137 = vmatprep.subr.mxu0 0.0
    %1138 = vmatpush1.msra.mxu0 %v604
    %1139 = vmatprep.subr.mxu0 0.0
    %1140 = vmatpush1.msra.mxu0 0.0
    %1141 = vmatprep.subr.mxu0 0.0
    %1142 = vmatpush1.msra.mxu0 0.0
    %1143 = vmatprep.subr.mxu0 0.0
    %1144 = vmatpush1.msra.mxu0 0.0
    %1145 = vmatprep.subr.mxu0 0.0
    %1146 = vmatpush1.msra.mxu0 0.0
    %1147 = vmatprep.subr.mxu0 0.0
    %1148 = vmatpush1.msra.mxu0 0.0
    %1149 = vmatprep.subr.mxu0 0.0
    %1150 = vmatpush1.msra.mxu0 0.0
    %1151 = vmatprep.subr.mxu0 0.0
    %1152 = vmatpush1.msra.mxu0 0.0
    %1153 = vmatprep.subr.mxu0 0.0
    %1154 = vmatpush1.msra.mxu0 0.0
    %1155 = vmatprep.subr.mxu0 0.0
    %1156 = vmatpush1.msra.mxu0 0.0
    %1157 = vmatprep.subr.mxu0 0.0
    %1158 = vmatpush1.msra.mxu0 0.0
    %1159 = vmatprep.subr.mxu0 0.0
    %1160 = vmatpush1.msra.mxu0 0.0
    %1161 = vmatprep.subr.mxu0 0.0
    %1162 = vmatpush1.msra.mxu0 0.0
    %1163 = vmatprep.subr.mxu0 0.0
    %1164 = vmatpush1.msra.mxu0 0.0
    %1165 = vmatprep.subr.mxu0 0.0
    %1166 = vmatpush1.msra.mxu0 0.0
    %1167 = vmatprep.subr.mxu0 0.0
    %1168 = vmatpush1.msra.mxu0 0.0
    %1169 = vmatprep.subr.mxu0 0.0
    %1170 = vmatpush1.msra.mxu0 0.0
    %1171 = vmatprep.subr.mxu0 0.0
    %1172 = vmatpush1.msra.mxu0 0.0
    %1173 = vmatprep.subr.mxu0 0.0
    %1174 = vmatpush1.msra.mxu0 0.0
    %1175 = vmatprep.subr.mxu0 0.0
    %1176 = vmatpush1.msra.mxu0 0.0
    %1177 = vmatprep.subr.mxu0 0.0
    %1178 = vmatpush1.msra.mxu0 0.0
    %1179 = vmatprep.subr.mxu0 0.0
    %1180 = vmatpush1.msra.mxu0 0.0
    %1181 = vmatprep.subr.mxu0 0.0
    %1182 = vmatpush1.msra.mxu0 0.0
    %1183 = vmatprep.subr.mxu0 0.0
    %1184 = vmatpush1.msra.mxu0 0.0
    %1185 = vmatprep.subr.mxu0 0.0
    %1186 = vmatpush1.msra.mxu0 0.0
    %1187 = vmatprep.subr.mxu0 0.0
    %1188 = vmatpush1.msra.mxu0 0.0
    %1189 = vmatprep.subr.mxu0 0.0
    %1190 = vmatpush1.msra.mxu0 0.0
    %1191 = vmatprep.subr.mxu0 0.0
    %1192 = vmatpush1.msra.mxu0 0.0
    %1193 = vmatprep.subr.mxu0 0.0
    %1194 = vmatpush1.msra.mxu0 0.0
    %1195 = vmatprep.mubr.f32.mxu0 0.0
    %1196 = vmatmul.mubr.f32.gmra.mrb[0].mxu0 %v1129
    %v1197 = vpop.f32.mrb[0].mxu0
    %v1198 = vadd.f32 0.0, %v1197
    %v1199 = vpop.f32.mrb[0].mxu0
    %1200 = vdwg.mxu0
    %v1202 = vrot.slane %v1198, 6
    %v1204 = vadd.f32 %v598, %v1202
    %v1205 = vxor.u32 %v1204, 2147483648
    %v1206 = vmul.f32 %v1205, 1.442695
    %v1207 = vpow.pop %v1206
    %v1208 = vadd.f32 %v1207, 1.0
    %v1209 = vrcp.pop %v1208
    %v1210 = vmul.f32 1.0, %v1209
    %v1211 = vtanh.pop %v1204
    %v1213 = vrot.slane %v1119, 6
    %v1215 = vmul.f32 %v1210, %v1213
    %1217 = vrot.lane.b32.xlu0 %v1211, 64
    %v1218 = vpop.permute.xlu0 %1217
    %v1220 = vmul.f32 %v1210, %v1218
    %1222 = vrot.lane.b32.xlu0 %v1220, 32
    %v1223 = vpop.permute.xlu0 %1222
    %v1225 = vadd.f32 %v1215, %v1223
    %v1226 = vtanh.pop %v1225
    %1228 = vrot.lane.b32.xlu0 %v1226, 64
    %v1229 = vpop.permute.xlu0 %1228
    %v1231 = vmul.f32 %v1210, %v1229
    %v1233 = vrot.slane %v1231, 2
    %1234 = vrot.lane.b32.xlu0 %v1233, 32
    %v1235 = vpop.permute.xlu0 %1234
    %v1236 = vsel %vm365, %v1235, 0
    %1238 = vmatprep.subr.mxu0 0.0
    %1239 = vmatpush1.msra.mxu0 %v601
    %1240 = vmatprep.subr.mxu0 0.0
    %1241 = vmatpush1.msra.mxu0 %v602
    %1242 = vmatprep.subr.mxu0 0.0
    %1243 = vmatpush1.msra.mxu0 %v603
    %1244 = vmatprep.subr.mxu0 0.0
    %1245 = vmatpush1.msra.mxu0 %v604
    %1246 = vmatprep.subr.mxu0 0.0
    %1247 = vmatpush1.msra.mxu0 0.0
    %1248 = vmatprep.subr.mxu0 0.0
    %1249 = vmatpush1.msra.mxu0 0.0
    %1250 = vmatprep.subr.mxu0 0.0
    %1251 = vmatpush1.msra.mxu0 0.0
    %1252 = vmatprep.subr.mxu0 0.0
    %1253 = vmatpush1.msra.mxu0 0.0
    %1254 = vmatprep.subr.mxu0 0.0
    %1255 = vmatpush1.msra.mxu0 0.0
    %1256 = vmatprep.subr.mxu0 0.0
    %1257 = vmatpush1.msra.mxu0 0.0
    %1258 = vmatprep.subr.mxu0 0.0
    %1259 = vmatpush1.msra.mxu0 0.0
    %1260 = vmatprep.subr.mxu0 0.0
    %1261 = vmatpush1.msra.mxu0 0.0
    %1262 = vmatprep.subr.mxu0 0.0
    %1263 = vmatpush1.msra.mxu0 0.0
    %1264 = vmatprep.subr.mxu0 0.0
    %1265 = vmatpush1.msra.mxu0 0.0
    %1266 = vmatprep.subr.mxu0 0.0
    %1267 = vmatpush1.msra.mxu0 0.0
    %1268 = vmatprep.subr.mxu0 0.0
    %1269 = vmatpush1.msra.mxu0 0.0
    %1270 = vmatprep.subr.mxu0 0.0
    %1271 = vmatpush1.msra.mxu0 0.0
    %1272 = vmatprep.subr.mxu0 0.0
    %1273 = vmatpush1.msra.mxu0 0.0
    %1274 = vmatprep.subr.mxu0 0.0
    %1275 = vmatpush1.msra.mxu0 0.0
    %1276 = vmatprep.subr.mxu0 0.0
    %1277 = vmatpush1.msra.mxu0 0.0
    %1278 = vmatprep.subr.mxu0 0.0
    %1279 = vmatpush1.msra.mxu0 0.0
    %1280 = vmatprep.subr.mxu0 0.0
    %1281 = vmatpush1.msra.mxu0 0.0
    %1282 = vmatprep.subr.mxu0 0.0
    %1283 = vmatpush1.msra.mxu0 0.0
    %1284 = vmatprep.subr.mxu0 0.0
    %1285 = vmatpush1.msra.mxu0 0.0
    %1286 = vmatprep.subr.mxu0 0.0
    %1287 = vmatpush1.msra.mxu0 0.0
    %1288 = vmatprep.subr.mxu0 0.0
    %1289 = vmatpush1.msra.mxu0 0.0
    %1290 = vmatprep.subr.mxu0 0.0
    %1291 = vmatpush1.msra.mxu0 0.0
    %1292 = vmatprep.subr.mxu0 0.0
    %1293 = vmatpush1.msra.mxu0 0.0
    %1294 = vmatprep.subr.mxu0 0.0
    %1295 = vmatpush1.msra.mxu0 0.0
    %1296 = vmatprep.subr.mxu0 0.0
    %1297 = vmatpush1.msra.mxu0 0.0
    %1298 = vmatprep.subr.mxu0 0.0
    %1299 = vmatpush1.msra.mxu0 0.0
    %1300 = vmatprep.subr.mxu0 0.0
    %1301 = vmatpush1.msra.mxu0 0.0
    %1302 = vmatprep.mubr.f32.mxu0 0.0
    %1303 = vmatmul.mubr.f32.gmra.mrb[0].mxu0 %v1236
    %v1304 = vpop.f32.mrb[0].mxu0
    %v1305 = vadd.f32 0.0, %v1304
    %v1306 = vpop.f32.mrb[0].mxu0
    %1307 = vdwg.mxu0
    %v1309 = vrot.slane %v1305, 4
    %v1311 = vadd.f32 %v598, %v1309
    %v1312 = vxor.u32 %v1311, 2147483648
    %v1313 = vmul.f32 %v1312, 1.442695
    %v1314 = vpow.pop %v1313
    %v1315 = vadd.f32 %v1314, 1.0
    %v1316 = vrcp.pop %v1315
    %v1317 = vmul.f32 1.0, %v1316
    %v1318 = vtanh.pop %v1311
    %v1320 = vrot.slane %v1225, 6
    %v1322 = vmul.f32 %v1317, %v1320
    %1324 = vrot.lane.b32.xlu0 %v1318, 64
    %v1325 = vpop.permute.xlu0 %1324
    %v1327 = vmul.f32 %v1317, %v1325
    %1329 = vrot.lane.b32.xlu0 %v1327, 32
    %v1330 = vpop.permute.xlu0 %1329
    %v1332 = vadd.f32 %v1322, %v1330
    %v1333 = vtanh.pop %v1332
    %1335 = vrot.lane.b32.xlu0 %v1333, 64
    %v1336 = vpop.permute.xlu0 %1335
    %v1338 = vmul.f32 %v1317, %v1336
    %v1340 = vrot.slane %v1338, 4
    %1341 = vrot.lane.b32.xlu0 %v1340, 32
    %v1342 = vpop.permute.xlu0 %1341
    %v1343 = vsel %vm365, %v1342, 0
    %1345 = vmatprep.subr.mxu0 0.0
    %1346 = vmatpush1.msra.mxu0 %v601
    %1347 = vmatprep.subr.mxu0 0.0
    %1348 = vmatpush1.msra.mxu0 %v602
    %1349 = vmatprep.subr.mxu0 0.0
    %1350 = vmatpush1.msra.mxu0 %v603
    %1351 = vmatprep.subr.mxu0 0.0
    %1352 = vmatpush1.msra.mxu0 %v604
    %1353 = vmatprep.subr.mxu0 0.0
    %1354 = vmatpush1.msra.mxu0 0.0
    %1355 = vmatprep.subr.mxu0 0.0
    %1356 = vmatpush1.msra.mxu0 0.0
    %1357 = vmatprep.subr.mxu0 0.0
    %1358 = vmatpush1.msra.mxu0 0.0
    %1359 = vmatprep.subr.mxu0 0.0
    %1360 = vmatpush1.msra.mxu0 0.0
    %1361 = vmatprep.subr.mxu0 0.0
    %1362 = vmatpush1.msra.mxu0 0.0
    %1363 = vmatprep.subr.mxu0 0.0
    %1364 = vmatpush1.msra.mxu0 0.0
    %1365 = vmatprep.subr.mxu0 0.0
    %1366 = vmatpush1.msra.mxu0 0.0
    %1367 = vmatprep.subr.mxu0 0.0
    %1368 = vmatpush1.msra.mxu0 0.0
    %1369 = vmatprep.subr.mxu0 0.0
    %1370 = vmatpush1.msra.mxu0 0.0
    %1371 = vmatprep.subr.mxu0 0.0
    %1372 = vmatpush1.msra.mxu0 0.0
    %1373 = vmatprep.subr.mxu0 0.0
    %1374 = vmatpush1.msra.mxu0 0.0
    %1375 = vmatprep.subr.mxu0 0.0
    %1376 = vmatpush1.msra.mxu0 0.0
    %1377 = vmatprep.subr.mxu0 0.0
    %1378 = vmatpush1.msra.mxu0 0.0
    %1379 = vmatprep.subr.mxu0 0.0
    %1380 = vmatpush1.msra.mxu0 0.0
    %1381 = vmatprep.subr.mxu0 0.0
    %1382 = vmatpush1.msra.mxu0 0.0
    %1383 = vmatprep.subr.mxu0 0.0
    %1384 = vmatpush1.msra.mxu0 0.0
    %1385 = vmatprep.subr.mxu0 0.0
    %1386 = vmatpush1.msra.mxu0 0.0
    %1387 = vmatprep.subr.mxu0 0.0
    %1388 = vmatpush1.msra.mxu0 0.0
    %1389 = vmatprep.subr.mxu0 0.0
    %1390 = vmatpush1.msra.mxu0 0.0
    %1391 = vmatprep.subr.mxu0 0.0
    %1392 = vmatpush1.msra.mxu0 0.0
    %1393 = vmatprep.subr.mxu0 0.0
    %1394 = vmatpush1.msra.mxu0 0.0
    %1395 = vmatprep.subr.mxu0 0.0
    %1396 = vmatpush1.msra.mxu0 0.0
    %1397 = vmatprep.subr.mxu0 0.0
    %1398 = vmatpush1.msra.mxu0 0.0
    %1399 = vmatprep.subr.mxu0 0.0
    %1400 = vmatpush1.msra.mxu0 0.0
    %1401 = vmatprep.subr.mxu0 0.0
    %1402 = vmatpush1.msra.mxu0 0.0
    %1403 = vmatprep.subr.mxu0 0.0
    %1404 = vmatpush1.msra.mxu0 0.0
    %1405 = vmatprep.subr.mxu0 0.0
    %1406 = vmatpush1.msra.mxu0 0.0
    %1407 = vmatprep.subr.mxu0 0.0
    %1408 = vmatpush1.msra.mxu0 0.0
    %1409 = vmatprep.mubr.f32.mxu0 0.0
    %1410 = vmatmul.mubr.f32.gmra.mrb[0].mxu0 %v1343
    %v1411 = vpop.f32.mrb[0].mxu0
    %v1412 = vadd.f32 0.0, %v1411
    %v1413 = vpop.f32.mrb[0].mxu0
    %1414 = vdwg.mxu0
    %v1416 = vrot.slane %v1412, 2
    %v1418 = vadd.f32 %v598, %v1416
    %v1419 = vxor.u32 %v1418, 2147483648
    %v1420 = vmul.f32 %v1419, 1.442695
    %v1421 = vpow.pop %v1420
    %v1422 = vadd.f32 %v1421, 1.0
    %v1423 = vrcp.pop %v1422
    %v1424 = vmul.f32 1.0, %v1423
    %v1425 = vtanh.pop %v1418
    %v1427 = vrot.slane %v1332, 6
    %v1429 = vmul.f32 %v1424, %v1427
    %1431 = vrot.lane.b32.xlu0 %v1425, 64
    %v1432 = vpop.permute.xlu0 %1431
    %v1434 = vmul.f32 %v1424, %v1432
    %1436 = vrot.lane.b32.xlu0 %v1434, 32
    %v1437 = vpop.permute.xlu0 %1436
    %v1439 = vadd.f32 %v1429, %v1437
    %v1440 = vtanh.pop %v1439
    %1442 = vrot.lane.b32.xlu0 %v1440, 64
    %v1443 = vpop.permute.xlu0 %1442
    %v1445 = vmul.f32 %v1424, %v1443
    %v1447 = vrot.slane %v1445, 6
    %v1448 = vld [vmem:[%s8] sm:$0xff]
    %v1449 = vld [vmem:[%s8 + $0x8] sm:$0xff]
    %v1450 = vld [vmem:[%s8 + $0x10] sm:$0xff]
    %v1451 = vld [vmem:[%s8 + $0x18] sm:$0xff]
    %v1452 = vld [vmem:[%s10] sm:$0x1]
    %v1454 = vlaneseq
    %v1455 = vshrl.u32 %v1454, 7
    %v1456 = vsub.s32 0, %v1455
    %v1457 = vrot.slane %v1452, %v1456
    %v1459 = vcombine.low %v701, %v809
    %v1460 = vcombine.low %v916, %v1023
    %v1462 = vunpack.c.l.s4 1983009808
    %v1463 = vunpack.c.0.s8 %v1462
    %v1464 = vlaneseq
    %v1465 = vshrl.u32 %v1464, 7
    %v1466 = vsub.s32 %v1463, %v1465
    %v1467 = vrot.slane %v1459, %v1466
    %v1469 = vunpack.c.l.s4 1983009808
    %v1470 = vunpack.c.0.s8 %v1469
    %v1471 = vlaneseq
    %v1472 = vshrl.u32 %v1471, 7
    %v1473 = vsub.s32 %v1470, %v1472
    %v1474 = vrot.slane %v1460, %v1473
    %v1475 = vcombine.low %v1467, %v1474
    %v1476 = vcombine.low %v1125, %v1233
    %v1477 = vcombine.low %v1340, %v1447
    %v1479 = vunpack.c.l.s4 1983009808
    %v1480 = vunpack.c.0.s8 %v1479
    %v1481 = vlaneseq
    %v1482 = vshrl.u32 %v1481, 7
    %v1483 = vsub.s32 %v1480, %v1482
    %v1484 = vrot.slane %v1476, %v1483
    %v1486 = vunpack.c.l.s4 1983009808
    %v1487 = vunpack.c.0.s8 %v1486
    %v1488 = vlaneseq
    %v1489 = vshrl.u32 %v1488, 7
    %v1490 = vsub.s32 %v1487, %v1489
    %v1491 = vrot.slane %v1477, %v1490
    %v1492 = vcombine.low %v1484, %v1491
    %1493 = vrot.lane.b32.xlu0 %v1475, 32
    %v1494 = vpop.permute.xlu0 %1493
    %1495 = vrot.lane.b32.xlu0 %v1492, 32
    %v1496 = vpop.permute.xlu0 %1495
    %v1497 = vsel %vm365, %v1494, 0
    %v1499 = vsel %vm365, %v1496, 0
    %1501 = vmatprep.subr.mxu0 0.0
    %1502 = vmatpush1.msra.mxu0 %v1448
    %1503 = vmatprep.subr.mxu0 0.0
    %1504 = vmatpush1.msra.mxu0 %v1449
    %1505 = vmatprep.subr.mxu0 0.0
    %1506 = vmatpush1.msra.mxu0 %v1450
    %1507 = vmatprep.subr.mxu0 0.0
    %1508 = vmatpush1.msra.mxu0 %v1451
    %1509 = vmatprep.subr.mxu0 0.0
    %1510 = vmatpush1.msra.mxu0 0.0
    %1511 = vmatprep.subr.mxu0 0.0
    %1512 = vmatpush1.msra.mxu0 0.0
    %1513 = vmatprep.subr.mxu0 0.0
    %1514 = vmatpush1.msra.mxu0 0.0
    %1515 = vmatprep.subr.mxu0 0.0
    %1516 = vmatpush1.msra.mxu0 0.0
    %1517 = vmatprep.subr.mxu0 0.0
    %1518 = vmatpush1.msra.mxu0 0.0
    %1519 = vmatprep.subr.mxu0 0.0
    %1520 = vmatpush1.msra.mxu0 0.0
    %1521 = vmatprep.subr.mxu0 0.0
    %1522 = vmatpush1.msra.mxu0 0.0
    %1523 = vmatprep.subr.mxu0 0.0
    %1524 = vmatpush1.msra.mxu0 0.0
    %1525 = vmatprep.subr.mxu0 0.0
    %1526 = vmatpush1.msra.mxu0 0.0
    %1527 = vmatprep.subr.mxu0 0.0
    %1528 = vmatpush1.msra.mxu0 0.0
    %1529 = vmatprep.subr.mxu0 0.0
    %1530 = vmatpush1.msra.mxu0 0.0
    %1531 = vmatprep.subr.mxu0 0.0
    %1532 = vmatpush1.msra.mxu0 0.0
    %1533 = vmatprep.subr.mxu0 0.0
    %1534 = vmatpush1.msra.mxu0 0.0
    %1535 = vmatprep.subr.mxu0 0.0
    %1536 = vmatpush1.msra.mxu0 0.0
    %1537 = vmatprep.subr.mxu0 0.0
    %1538 = vmatpush1.msra.mxu0 0.0
    %1539 = vmatprep.subr.mxu0 0.0
    %1540 = vmatpush1.msra.mxu0 0.0
    %1541 = vmatprep.subr.mxu0 0.0
    %1542 = vmatpush1.msra.mxu0 0.0
    %1543 = vmatprep.subr.mxu0 0.0
    %1544 = vmatpush1.msra.mxu0 0.0
    %1545 = vmatprep.subr.mxu0 0.0
    %1546 = vmatpush1.msra.mxu0 0.0
    %1547 = vmatprep.subr.mxu0 0.0
    %1548 = vmatpush1.msra.mxu0 0.0
    %1549 = vmatprep.subr.mxu0 0.0
    %1550 = vmatpush1.msra.mxu0 0.0
    %1551 = vmatprep.subr.mxu0 0.0
    %1552 = vmatpush1.msra.mxu0 0.0
    %1553 = vmatprep.subr.mxu0 0.0
    %1554 = vmatpush1.msra.mxu0 0.0
    %1555 = vmatprep.subr.mxu0 0.0
    %1556 = vmatpush1.msra.mxu0 0.0
    %1557 = vmatprep.subr.mxu0 0.0
    %1558 = vmatpush1.msra.mxu0 0.0
    %1559 = vmatprep.subr.mxu0 0.0
    %1560 = vmatpush1.msra.mxu0 0.0
    %1561 = vmatprep.subr.mxu0 0.0
    %1562 = vmatpush1.msra.mxu0 0.0
    %1563 = vmatprep.subr.mxu0 0.0
    %1564 = vmatpush1.msra.mxu0 0.0
    %1565 = vmatprep.mubr.f32.mxu0 0.0
    %1566 = vmatmul.mubr.f32.gmra.mrb[0].mxu0 %v1497
    %v1567 = vpop.f32.mrb[0].mxu0
    %v1568 = vadd.f32 %v1457, %v1567
    %v1569 = vpop.f32.mrb[0].mxu0
    %1570 = vmatprep.mubr.f32.mxu0 0.0
    %1571 = vmatmul.mubr.f32.gmra.mrb[0].mxu0 %v1499
    %v1572 = vpop.f32.mrb[0].mxu0
    %v1573 = vadd.f32 %v1457, %v1572
    %v1574 = vpop.f32.mrb[0].mxu0
    %1575 = vdwg.mxu0
    %v1576 = vld [vmem:[%s9] sm:$0xff]
    %v1577 = vld [vmem:[%s9 + $0x8] sm:$0xff]
    %v1578 = vld [vmem:[%s9 + $0x10] sm:$0xff]
    %v1579 = vld [vmem:[%s9 + $0x18] sm:$0xff]
    %1580 = vmatprep.subr.mxu0 0.0
    %1581 = vmatpush1.msra.mxu0 %v1576
    %1582 = vmatprep.subr.mxu0 0.0
    %1583 = vmatpush1.msra.mxu0 %v1577
    %1584 = vmatprep.subr.mxu0 0.0
    %1585 = vmatpush1.msra.mxu0 %v1578
    %1586 = vmatprep.subr.mxu0 0.0
    %1587 = vmatpush1.msra.mxu0 %v1579
    %1588 = vmatprep.subr.mxu0 0.0
    %1589 = vmatpush1.msra.mxu0 0.0
    %1590 = vmatprep.subr.mxu0 0.0
    %1591 = vmatpush1.msra.mxu0 0.0
    %1592 = vmatprep.subr.mxu0 0.0
    %1593 = vmatpush1.msra.mxu0 0.0
    %1594 = vmatprep.subr.mxu0 0.0
    %1595 = vmatpush1.msra.mxu0 0.0
    %1596 = vmatprep.subr.mxu0 0.0
    %1597 = vmatpush1.msra.mxu0 0.0
    %1598 = vmatprep.subr.mxu0 0.0
    %1599 = vmatpush1.msra.mxu0 0.0
    %1600 = vmatprep.subr.mxu0 0.0
    %1601 = vmatpush1.msra.mxu0 0.0
    %1602 = vmatprep.subr.mxu0 0.0
    %1603 = vmatpush1.msra.mxu0 0.0
    %1604 = vmatprep.subr.mxu0 0.0
    %1605 = vmatpush1.msra.mxu0 0.0
    %1606 = vmatprep.subr.mxu0 0.0
    %1607 = vmatpush1.msra.mxu0 0.0
    %1608 = vmatprep.subr.mxu0 0.0
    %1609 = vmatpush1.msra.mxu0 0.0
    %1610 = vmatprep.subr.mxu0 0.0
    %1611 = vmatpush1.msra.mxu0 0.0
    %1612 = vmatprep.subr.mxu0 0.0
    %1613 = vmatpush1.msra.mxu0 0.0
    %1614 = vmatprep.subr.mxu0 0.0
    %1615 = vmatpush1.msra.mxu0 0.0
    %1616 = vmatprep.subr.mxu0 0.0
    %1617 = vmatpush1.msra.mxu0 0.0
    %1618 = vmatprep.subr.mxu0 0.0
    %1619 = vmatpush1.msra.mxu0 0.0
    %1620 = vmatprep.subr.mxu0 0.0
    %1621 = vmatpush1.msra.mxu0 0.0
    %1622 = vmatprep.subr.mxu0 0.0
    %1623 = vmatpush1.msra.mxu0 0.0
    %1624 = vmatprep.subr.mxu0 0.0
    %1625 = vmatpush1.msra.mxu0 0.0
    %1626 = vmatprep.subr.mxu0 0.0
    %1627 = vmatpush1.msra.mxu0 0.0
    %1628 = vmatprep.subr.mxu0 0.0
    %1629 = vmatpush1.msra.mxu0 0.0
    %1630 = vmatprep.subr.mxu0 0.0
    %1631 = vmatpush1.msra.mxu0 0.0
    %1632 = vmatprep.subr.mxu0 0.0
    %1633 = vmatpush1.msra.mxu0 0.0
    %1634 = vmatprep.subr.mxu0 0.0
    %1635 = vmatpush1.msra.mxu0 0.0
    %1636 = vmatprep.subr.mxu0 0.0
    %1637 = vmatpush1.msra.mxu0 0.0
    %1638 = vmatprep.subr.mxu0 0.0
    %1639 = vmatpush1.msra.mxu0 0.0
    %1640 = vmatprep.subr.mxu0 0.0
    %1641 = vmatpush1.msra.mxu0 0.0
    %1642 = vmatprep.subr.mxu0 0.0
    %1643 = vmatpush1.msra.mxu0 0.0
    %1644 = vmatprep.mubr.f32.mxu0 0.0
    %1645 = vmatmul.mubr.f32.gmra.mrb[0].mxu0 %v605
    %v1646 = vpop.f32.mrb[0].mxu0
    %v1647 = vadd.f32 0.0, %v1646
    %v1648 = vpop.f32.mrb[0].mxu0
    %1649 = vdwg.mxu0
    %v1650 = vadd.f32 %v1568, %v1647
    %v1651 = vxor.u32 %v1650, 2147483648
    %v1652 = vmul.f32 %v1651, 1.442695
    %v1653 = vpow.pop %v1652
    %v1654 = vadd.f32 %v1653, 1.0
    %v1655 = vrcp.pop %v1654
    %v1656 = vmul.f32 1.0, %v1655
    %v1657 = vtanh.pop %v1650
    %v1658 = vmul.f32 %v1656, 0.0
    %1660 = vrot.lane.b32.xlu0 %v1657, 64
    %v1661 = vpop.permute.xlu0 %1660
    %v1663 = vmul.f32 %v1656, %v1661
    %1665 = vrot.lane.b32.xlu0 %v1663, 32
    %v1666 = vpop.permute.xlu0 %1665
    %v1668 = vadd.f32 %v1658, %v1666
    %v1669 = vtanh.pop %v1668
    %1671 = vrot.lane.b32.xlu0 %v1669, 64
    %v1672 = vpop.permute.xlu0 %1671
    %v1674 = vmul.f32 %v1656, %v1672
    %1676 = vrot.lane.b32.xlu0 %v1674, 32
    %v1677 = vpop.permute.xlu0 %1676
    %v1678 = vsel %vm365, %v1677, 0
    %1680 = vmatprep.subr.mxu0 0.0
    %1681 = vmatpush1.msra.mxu0 %v1576
    %1682 = vmatprep.subr.mxu0 0.0
    %1683 = vmatpush1.msra.mxu0 %v1577
    %1684 = vmatprep.subr.mxu0 0.0
    %1685 = vmatpush1.msra.mxu0 %v1578
    %1686 = vmatprep.subr.mxu0 0.0
    %1687 = vmatpush1.msra.mxu0 %v1579
    %1688 = vmatprep.subr.mxu0 0.0
    %1689 = vmatpush1.msra.mxu0 0.0
    %1690 = vmatprep.subr.mxu0 0.0
    %1691 = vmatpush1.msra.mxu0 0.0
    %1692 = vmatprep.subr.mxu0 0.0
    %1693 = vmatpush1.msra.mxu0 0.0
    %1694 = vmatprep.subr.mxu0 0.0
    %1695 = vmatpush1.msra.mxu0 0.0
    %1696 = vmatprep.subr.mxu0 0.0
    %1697 = vmatpush1.msra.mxu0 0.0
    %1698 = vmatprep.subr.mxu0 0.0
    %1699 = vmatpush1.msra.mxu0 0.0
    %1700 = vmatprep.subr.mxu0 0.0
    %1701 = vmatpush1.msra.mxu0 0.0
    %1702 = vmatprep.subr.mxu0 0.0
    %1703 = vmatpush1.msra.mxu0 0.0
    %1704 = vmatprep.subr.mxu0 0.0
    %1705 = vmatpush1.msra.mxu0 0.0
    %1706 = vmatprep.subr.mxu0 0.0
    %1707 = vmatpush1.msra.mxu0 0.0
    %1708 = vmatprep.subr.mxu0 0.0
    %1709 = vmatpush1.msra.mxu0 0.0
    %1710 = vmatprep.subr.mxu0 0.0
    %1711 = vmatpush1.msra.mxu0 0.0
    %1712 = vmatprep.subr.mxu0 0.0
    %1713 = vmatpush1.msra.mxu0 0.0
    %1714 = vmatprep.subr.mxu0 0.0
    %1715 = vmatpush1.msra.mxu0 0.0
    %1716 = vmatprep.subr.mxu0 0.0
    %1717 = vmatpush1.msra.mxu0 0.0
    %1718 = vmatprep.subr.mxu0 0.0
    %1719 = vmatpush1.msra.mxu0 0.0
    %1720 = vmatprep.subr.mxu0 0.0
    %1721 = vmatpush1.msra.mxu0 0.0
    %1722 = vmatprep.subr.mxu0 0.0
    %1723 = vmatpush1.msra.mxu0 0.0
    %1724 = vmatprep.subr.mxu0 0.0
    %1725 = vmatpush1.msra.mxu0 0.0
    %1726 = vmatprep.subr.mxu0 0.0
    %1727 = vmatpush1.msra.mxu0 0.0
    %1728 = vmatprep.subr.mxu0 0.0
    %1729 = vmatpush1.msra.mxu0 0.0
    %1730 = vmatprep.subr.mxu0 0.0
    %1731 = vmatpush1.msra.mxu0 0.0
    %1732 = vmatprep.subr.mxu0 0.0
    %1733 = vmatpush1.msra.mxu0 0.0
    %1734 = vmatprep.subr.mxu0 0.0
    %1735 = vmatpush1.msra.mxu0 0.0
    %1736 = vmatprep.subr.mxu0 0.0
    %1737 = vmatpush1.msra.mxu0 0.0
    %1738 = vmatprep.subr.mxu0 0.0
    %1739 = vmatpush1.msra.mxu0 0.0
    %1740 = vmatprep.subr.mxu0 0.0
    %1741 = vmatpush1.msra.mxu0 0.0
    %1742 = vmatprep.subr.mxu0 0.0
    %1743 = vmatpush1.msra.mxu0 0.0
    %1744 = vmatprep.mubr.f32.mxu0 0.0
    %1745 = vmatmul.mubr.f32.gmra.mrb[0].mxu0 %v1678
    %v1746 = vpop.f32.mrb[0].mxu0
    %v1747 = vadd.f32 0.0, %v1746
    %v1748 = vpop.f32.mrb[0].mxu0
    %1749 = vdwg.mxu0
    %v1751 = vrot.slane %v1747, 6
    %v1753 = vadd.f32 %v1568, %v1751
    %v1754 = vxor.u32 %v1753, 2147483648
    %v1755 = vmul.f32 %v1754, 1.442695
    %v1756 = vpow.pop %v1755
    %v1757 = vadd.f32 %v1756, 1.0
    %v1758 = vrcp.pop %v1757
    %v1759 = vmul.f32 1.0, %v1758
    %v1760 = vtanh.pop %v1753
    %v1762 = vrot.slane %v1668, 6
    %v1764 = vmul.f32 %v1759, %v1762
    %1766 = vrot.lane.b32.xlu0 %v1760, 64
    %v1767 = vpop.permute.xlu0 %1766
    %v1769 = vmul.f32 %v1759, %v1767
    %1771 = vrot.lane.b32.xlu0 %v1769, 32
    %v1772 = vpop.permute.xlu0 %1771
    %v1774 = vadd.f32 %v1764, %v1772
    %v1775 = vtanh.pop %v1774
    %1777 = vrot.lane.b32.xlu0 %v1775, 64
    %v1778 = vpop.permute.xlu0 %1777
    %v1780 = vmul.f32 %v1759, %v1778
    %v1782 = vrot.slane %v1780, 2
    %1783 = vrot.lane.b32.xlu0 %v1782, 32
    %v1784 = vpop.permute.xlu0 %1783
    %v1785 = vsel %vm365, %v1784, 0
    %1787 = vmatprep.subr.mxu0 0.0
    %1788 = vmatpush1.msra.mxu0 %v1576
    %1789 = vmatprep.subr.mxu0 0.0
    %1790 = vmatpush1.msra.mxu0 %v1577
    %1791 = vmatprep.subr.mxu0 0.0
    %1792 = vmatpush1.msra.mxu0 %v1578
    %1793 = vmatprep.subr.mxu0 0.0
    %1794 = vmatpush1.msra.mxu0 %v1579
    %1795 = vmatprep.subr.mxu0 0.0
    %1796 = vmatpush1.msra.mxu0 0.0
    %1797 = vmatprep.subr.mxu0 0.0
    %1798 = vmatpush1.msra.mxu0 0.0
    %1799 = vmatprep.subr.mxu0 0.0
    %1800 = vmatpush1.msra.mxu0 0.0
    %1801 = vmatprep.subr.mxu0 0.0
    %1802 = vmatpush1.msra.mxu0 0.0
    %1803 = vmatprep.subr.mxu0 0.0
    %1804 = vmatpush1.msra.mxu0 0.0
    %1805 = vmatprep.subr.mxu0 0.0
    %1806 = vmatpush1.msra.mxu0 0.0
    %1807 = vmatprep.subr.mxu0 0.0
    %1808 = vmatpush1.msra.mxu0 0.0
    %1809 = vmatprep.subr.mxu0 0.0
    %1810 = vmatpush1.msra.mxu0 0.0
    %1811 = vmatprep.subr.mxu0 0.0
    %1812 = vmatpush1.msra.mxu0 0.0
    %1813 = vmatprep.subr.mxu0 0.0
    %1814 = vmatpush1.msra.mxu0 0.0
    %1815 = vmatprep.subr.mxu0 0.0
    %1816 = vmatpush1.msra.mxu0 0.0
    %1817 = vmatprep.subr.mxu0 0.0
    %1818 = vmatpush1.msra.mxu0 0.0
    %1819 = vmatprep.subr.mxu0 0.0
    %1820 = vmatpush1.msra.mxu0 0.0
    %1821 = vmatprep.subr.mxu0 0.0
    %1822 = vmatpush1.msra.mxu0 0.0
    %1823 = vmatprep.subr.mxu0 0.0
    %1824 = vmatpush1.msra.mxu0 0.0
    %1825 = vmatprep.subr.mxu0 0.0
    %1826 = vmatpush1.msra.mxu0 0.0
    %1827 = vmatprep.subr.mxu0 0.0
    %1828 = vmatpush1.msra.mxu0 0.0
    %1829 = vmatprep.subr.mxu0 0.0
    %1830 = vmatpush1.msra.mxu0 0.0
    %1831 = vmatprep.subr.mxu0 0.0
    %1832 = vmatpush1.msra.mxu0 0.0
    %1833 = vmatprep.subr.mxu0 0.0
    %1834 = vmatpush1.msra.mxu0 0.0
    %1835 = vmatprep.subr.mxu0 0.0
    %1836 = vmatpush1.msra.mxu0 0.0
    %1837 = vmatprep.subr.mxu0 0.0
    %1838 = vmatpush1.msra.mxu0 0.0
    %1839 = vmatprep.subr.mxu0 0.0
    %1840 = vmatpush1.msra.mxu0 0.0
    %1841 = vmatprep.subr.mxu0 0.0
    %1842 = vmatpush1.msra.mxu0 0.0
    %1843 = vmatprep.subr.mxu0 0.0
    %1844 = vmatpush1.msra.mxu0 0.0
    %1845 = vmatprep.subr.mxu0 0.0
    %1846 = vmatpush1.msra.mxu0 0.0
    %1847 = vmatprep.subr.mxu0 0.0
    %1848 = vmatpush1.msra.mxu0 0.0
    %1849 = vmatprep.subr.mxu0 0.0
    %1850 = vmatpush1.msra.mxu0 0.0
    %1851 = vmatprep.mubr.f32.mxu0 0.0
    %1852 = vmatmul.mubr.f32.gmra.mrb[0].mxu0 %v1785
    %v1853 = vpop.f32.mrb[0].mxu0
    %v1854 = vadd.f32 0.0, %v1853
    %v1855 = vpop.f32.mrb[0].mxu0
    %1856 = vdwg.mxu0
    %v1858 = vrot.slane %v1854, 4
    %v1860 = vadd.f32 %v1568, %v1858
    %v1861 = vxor.u32 %v1860, 2147483648
    %v1862 = vmul.f32 %v1861, 1.442695
    %v1863 = vpow.pop %v1862
    %v1864 = vadd.f32 %v1863, 1.0
    %v1865 = vrcp.pop %v1864
    %v1866 = vmul.f32 1.0, %v1865
    %v1867 = vtanh.pop %v1860
    %v1869 = vrot.slane %v1774, 6
    %v1871 = vmul.f32 %v1866, %v1869
    %1873 = vrot.lane.b32.xlu0 %v1867, 64
    %v1874 = vpop.permute.xlu0 %1873
    %v1876 = vmul.f32 %v1866, %v1874
    %1878 = vrot.lane.b32.xlu0 %v1876, 32
    %v1879 = vpop.permute.xlu0 %1878
    %v1881 = vadd.f32 %v1871, %v1879
    %v1882 = vtanh.pop %v1881
    %1884 = vrot.lane.b32.xlu0 %v1882, 64
    %v1885 = vpop.permute.xlu0 %1884
    %v1887 = vmul.f32 %v1866, %v1885
    %v1889 = vrot.slane %v1887, 4
    %1890 = vrot.lane.b32.xlu0 %v1889, 32
    %v1891 = vpop.permute.xlu0 %1890
    %v1892 = vsel %vm365, %v1891, 0
    %1894 = vmatprep.subr.mxu0 0.0
    %1895 = vmatpush1.msra.mxu0 %v1576
    %1896 = vmatprep.subr.mxu0 0.0
    %1897 = vmatpush1.msra.mxu0 %v1577
    %1898 = vmatprep.subr.mxu0 0.0
    %1899 = vmatpush1.msra.mxu0 %v1578
    %1900 = vmatprep.subr.mxu0 0.0
    %1901 = vmatpush1.msra.mxu0 %v1579
    %1902 = vmatprep.subr.mxu0 0.0
    %1903 = vmatpush1.msra.mxu0 0.0
    %1904 = vmatprep.subr.mxu0 0.0
    %1905 = vmatpush1.msra.mxu0 0.0
    %1906 = vmatprep.subr.mxu0 0.0
    %1907 = vmatpush1.msra.mxu0 0.0
    %1908 = vmatprep.subr.mxu0 0.0
    %1909 = vmatpush1.msra.mxu0 0.0
    %1910 = vmatprep.subr.mxu0 0.0
    %1911 = vmatpush1.msra.mxu0 0.0
    %1912 = vmatprep.subr.mxu0 0.0
    %1913 = vmatpush1.msra.mxu0 0.0
    %1914 = vmatprep.subr.mxu0 0.0
    %1915 = vmatpush1.msra.mxu0 0.0
    %1916 = vmatprep.subr.mxu0 0.0
    %1917 = vmatpush1.msra.mxu0 0.0
    %1918 = vmatprep.subr.mxu0 0.0
    %1919 = vmatpush1.msra.mxu0 0.0
    %1920 = vmatprep.subr.mxu0 0.0
    %1921 = vmatpush1.msra.mxu0 0.0
    %1922 = vmatprep.subr.mxu0 0.0
    %1923 = vmatpush1.msra.mxu0 0.0
    %1924 = vmatprep.subr.mxu0 0.0
    %1925 = vmatpush1.msra.mxu0 0.0
    %1926 = vmatprep.subr.mxu0 0.0
    %1927 = vmatpush1.msra.mxu0 0.0
    %1928 = vmatprep.subr.mxu0 0.0
    %1929 = vmatpush1.msra.mxu0 0.0
    %1930 = vmatprep.subr.mxu0 0.0
    %1931 = vmatpush1.msra.mxu0 0.0
    %1932 = vmatprep.subr.mxu0 0.0
    %1933 = vmatpush1.msra.mxu0 0.0
    %1934 = vmatprep.subr.mxu0 0.0
    %1935 = vmatpush1.msra.mxu0 0.0
    %1936 = vmatprep.subr.mxu0 0.0
    %1937 = vmatpush1.msra.mxu0 0.0
    %1938 = vmatprep.subr.mxu0 0.0
    %1939 = vmatpush1.msra.mxu0 0.0
    %1940 = vmatprep.subr.mxu0 0.0
    %1941 = vmatpush1.msra.mxu0 0.0
    %1942 = vmatprep.subr.mxu0 0.0
    %1943 = vmatpush1.msra.mxu0 0.0
    %1944 = vmatprep.subr.mxu0 0.0
    %1945 = vmatpush1.msra.mxu0 0.0
    %1946 = vmatprep.subr.mxu0 0.0
    %1947 = vmatpush1.msra.mxu0 0.0
    %1948 = vmatprep.subr.mxu0 0.0
    %1949 = vmatpush1.msra.mxu0 0.0
    %1950 = vmatprep.subr.mxu0 0.0
    %1951 = vmatpush1.msra.mxu0 0.0
    %1952 = vmatprep.subr.mxu0 0.0
    %1953 = vmatpush1.msra.mxu0 0.0
    %1954 = vmatprep.subr.mxu0 0.0
    %1955 = vmatpush1.msra.mxu0 0.0
    %1956 = vmatprep.subr.mxu0 0.0
    %1957 = vmatpush1.msra.mxu0 0.0
    %1958 = vmatprep.mubr.f32.mxu0 0.0
    %1959 = vmatmul.mubr.f32.gmra.mrb[0].mxu0 %v1892
    %v1960 = vpop.f32.mrb[0].mxu0
    %v1961 = vadd.f32 0.0, %v1960
    %v1962 = vpop.f32.mrb[0].mxu0
    %1963 = vdwg.mxu0
    %v1965 = vrot.slane %v1961, 2
    %v1967 = vadd.f32 %v1568, %v1965
    %v1968 = vxor.u32 %v1967, 2147483648
    %v1969 = vmul.f32 %v1968, 1.442695
    %v1970 = vpow.pop %v1969
    %v1971 = vadd.f32 %v1970, 1.0
    %v1972 = vrcp.pop %v1971
    %v1973 = vmul.f32 1.0, %v1972
    %v1974 = vtanh.pop %v1967
    %v1976 = vrot.slane %v1881, 6
    %v1978 = vmul.f32 %v1973, %v1976
    %1980 = vrot.lane.b32.xlu0 %v1974, 64
    %v1981 = vpop.permute.xlu0 %1980
    %v1983 = vmul.f32 %v1973, %v1981
    %1985 = vrot.lane.b32.xlu0 %v1983, 32
    %v1986 = vpop.permute.xlu0 %1985
    %v1988 = vadd.f32 %v1978, %v1986
    %v1989 = vtanh.pop %v1988
    %1991 = vrot.lane.b32.xlu0 %v1989, 64
    %v1992 = vpop.permute.xlu0 %1991
    %v1994 = vmul.f32 %v1973, %v1992
    %v1996 = vrot.slane %v1994, 6
    %1997 = vrot.lane.b32.xlu0 %v1996, 32
    %v1998 = vpop.permute.xlu0 %1997
    %v1999 = vsel %vm365, %v1998, 0
    %2001 = vmatprep.subr.mxu0 0.0
    %2002 = vmatpush1.msra.mxu0 %v1576
    %2003 = vmatprep.subr.mxu0 0.0
    %2004 = vmatpush1.msra.mxu0 %v1577
    %2005 = vmatprep.subr.mxu0 0.0
    %2006 = vmatpush1.msra.mxu0 %v1578
    %2007 = vmatprep.subr.mxu0 0.0
    %2008 = vmatpush1.msra.mxu0 %v1579
    %2009 = vmatprep.subr.mxu0 0.0
    %2010 = vmatpush1.msra.mxu0 0.0
    %2011 = vmatprep.subr.mxu0 0.0
    %2012 = vmatpush1.msra.mxu0 0.0
    %2013 = vmatprep.subr.mxu0 0.0
    %2014 = vmatpush1.msra.mxu0 0.0
    %2015 = vmatprep.subr.mxu0 0.0
    %2016 = vmatpush1.msra.mxu0 0.0
    %2017 = vmatprep.subr.mxu0 0.0
    %2018 = vmatpush1.msra.mxu0 0.0
    %2019 = vmatprep.subr.mxu0 0.0
    %2020 = vmatpush1.msra.mxu0 0.0
    %2021 = vmatprep.subr.mxu0 0.0
    %2022 = vmatpush1.msra.mxu0 0.0
    %2023 = vmatprep.subr.mxu0 0.0
    %2024 = vmatpush1.msra.mxu0 0.0
    %2025 = vmatprep.subr.mxu0 0.0
    %2026 = vmatpush1.msra.mxu0 0.0
    %2027 = vmatprep.subr.mxu0 0.0
    %2028 = vmatpush1.msra.mxu0 0.0
    %2029 = vmatprep.subr.mxu0 0.0
    %2030 = vmatpush1.msra.mxu0 0.0
    %2031 = vmatprep.subr.mxu0 0.0
    %2032 = vmatpush1.msra.mxu0 0.0
    %2033 = vmatprep.subr.mxu0 0.0
    %2034 = vmatpush1.msra.mxu0 0.0
    %2035 = vmatprep.subr.mxu0 0.0
    %2036 = vmatpush1.msra.mxu0 0.0
    %2037 = vmatprep.subr.mxu0 0.0
    %2038 = vmatpush1.msra.mxu0 0.0
    %2039 = vmatprep.subr.mxu0 0.0
    %2040 = vmatpush1.msra.mxu0 0.0
    %2041 = vmatprep.subr.mxu0 0.0
    %2042 = vmatpush1.msra.mxu0 0.0
    %2043 = vmatprep.subr.mxu0 0.0
    %2044 = vmatpush1.msra.mxu0 0.0
    %2045 = vmatprep.subr.mxu0 0.0
    %2046 = vmatpush1.msra.mxu0 0.0
    %2047 = vmatprep.subr.mxu0 0.0
    %2048 = vmatpush1.msra.mxu0 0.0
    %2049 = vmatprep.subr.mxu0 0.0
    %2050 = vmatpush1.msra.mxu0 0.0
    %2051 = vmatprep.subr.mxu0 0.0
    %2052 = vmatpush1.msra.mxu0 0.0
    %2053 = vmatprep.subr.mxu0 0.0
    %2054 = vmatpush1.msra.mxu0 0.0
    %2055 = vmatprep.subr.mxu0 0.0
    %2056 = vmatpush1.msra.mxu0 0.0
    %2057 = vmatprep.subr.mxu0 0.0
    %2058 = vmatpush1.msra.mxu0 0.0
    %2059 = vmatprep.subr.mxu0 0.0
    %2060 = vmatpush1.msra.mxu0 0.0
    %2061 = vmatprep.subr.mxu0 0.0
    %2062 = vmatpush1.msra.mxu0 0.0
    %2063 = vmatprep.subr.mxu0 0.0
    %2064 = vmatpush1.msra.mxu0 0.0
    %2065 = vmatprep.mubr.f32.mxu0 0.0
    %2066 = vmatmul.mubr.f32.gmra.mrb[0].mxu0 %v1999
    %v2067 = vpop.f32.mrb[0].mxu0
    %v2068 = vadd.f32 0.0, %v2067
    %v2069 = vpop.f32.mrb[0].mxu0
    %2070 = vdwg.mxu0
    %v2071 = vadd.f32 %v1573, %v2068
    %v2072 = vxor.u32 %v2071, 2147483648
    %v2073 = vmul.f32 %v2072, 1.442695
    %v2074 = vpow.pop %v2073
    %v2075 = vadd.f32 %v2074, 1.0
    %v2076 = vrcp.pop %v2075
    %v2077 = vmul.f32 1.0, %v2076
    %v2078 = vtanh.pop %v2071
    %v2080 = vrot.slane %v1988, 6
    %v2082 = vmul.f32 %v2077, %v2080
    %2084 = vrot.lane.b32.xlu0 %v2078, 64
    %v2085 = vpop.permute.xlu0 %2084
    %v2087 = vmul.f32 %v2077, %v2085
    %2089 = vrot.lane.b32.xlu0 %v2087, 32
    %v2090 = vpop.permute.xlu0 %2089
    %v2092 = vadd.f32 %v2082, %v2090
    %v2093 = vtanh.pop %v2092
    %2095 = vrot.lane.b32.xlu0 %v2093, 64
    %v2096 = vpop.permute.xlu0 %2095
    %v2098 = vmul.f32 %v2077, %v2096
    %2100 = vrot.lane.b32.xlu0 %v2098, 32
    %v2101 = vpop.permute.xlu0 %2100
    %v2102 = vsel %vm365, %v2101, 0
    %2104 = vmatprep.subr.mxu0 0.0
    %2105 = vmatpush1.msra.mxu0 %v1576
    %2106 = vmatprep.subr.mxu0 0.0
    %2107 = vmatpush1.msra.mxu0 %v1577
    %2108 = vmatprep.subr.mxu0 0.0
    %2109 = vmatpush1.msra.mxu0 %v1578
    %2110 = vmatprep.subr.mxu0 0.0
    %2111 = vmatpush1.msra.mxu0 %v1579
    %2112 = vmatprep.subr.mxu0 0.0
    %2113 = vmatpush1.msra.mxu0 0.0
    %2114 = vmatprep.subr.mxu0 0.0
    %2115 = vmatpush1.msra.mxu0 0.0
    %2116 = vmatprep.subr.mxu0 0.0
    %2117 = vmatpush1.msra.mxu0 0.0
    %2118 = vmatprep.subr.mxu0 0.0
    %2119 = vmatpush1.msra.mxu0 0.0
    %2120 = vmatprep.subr.mxu0 0.0
    %2121 = vmatpush1.msra.mxu0 0.0
    %2122 = vmatprep.subr.mxu0 0.0
    %2123 = vmatpush1.msra.mxu0 0.0
    %2124 = vmatprep.subr.mxu0 0.0
    %2125 = vmatpush1.msra.mxu0 0.0
    %2126 = vmatprep.subr.mxu0 0.0
    %2127 = vmatpush1.msra.mxu0 0.0
    %2128 = vmatprep.subr.mxu0 0.0
    %2129 = vmatpush1.msra.mxu0 0.0
    %2130 = vmatprep.subr.mxu0 0.0
    %2131 = vmatpush1.msra.mxu0 0.0
    %2132 = vmatprep.subr.mxu0 0.0
    %2133 = vmatpush1.msra.mxu0 0.0
    %2134 = vmatprep.subr.mxu0 0.0
    %2135 = vmatpush1.msra.mxu0 0.0
    %2136 = vmatprep.subr.mxu0 0.0
    %2137 = vmatpush1.msra.mxu0 0.0
    %2138 = vmatprep.subr.mxu0 0.0
    %2139 = vmatpush1.msra.mxu0 0.0
    %2140 = vmatprep.subr.mxu0 0.0
    %2141 = vmatpush1.msra.mxu0 0.0
    %2142 = vmatprep.subr.mxu0 0.0
    %2143 = vmatpush1.msra.mxu0 0.0
    %2144 = vmatprep.subr.mxu0 0.0
    %2145 = vmatpush1.msra.mxu0 0.0
    %2146 = vmatprep.subr.mxu0 0.0
    %2147 = vmatpush1.msra.mxu0 0.0
    %2148 = vmatprep.subr.mxu0 0.0
    %2149 = vmatpush1.msra.mxu0 0.0
    %2150 = vmatprep.subr.mxu0 0.0
    %2151 = vmatpush1.msra.mxu0 0.0
    %2152 = vmatprep.subr.mxu0 0.0
    %2153 = vmatpush1.msra.mxu0 0.0
    %2154 = vmatprep.subr.mxu0 0.0
    %2155 = vmatpush1.msra.mxu0 0.0
    %2156 = vmatprep.subr.mxu0 0.0
    %2157 = vmatpush1.msra.mxu0 0.0
    %2158 = vmatprep.subr.mxu0 0.0
    %2159 = vmatpush1.msra.mxu0 0.0
    %2160 = vmatprep.subr.mxu0 0.0
    %2161 = vmatpush1.msra.mxu0 0.0
    %2162 = vmatprep.subr.mxu0 0.0
    %2163 = vmatpush1.msra.mxu0 0.0
    %2164 = vmatprep.subr.mxu0 0.0
    %2165 = vmatpush1.msra.mxu0 0.0
    %2166 = vmatprep.subr.mxu0 0.0
    %2167 = vmatpush1.msra.mxu0 0.0
    %2168 = vmatprep.mubr.f32.mxu0 0.0
    %2169 = vmatmul.mubr.f32.gmra.mrb[0].mxu0 %v2102
    %v2170 = vpop.f32.mrb[0].mxu0
    %v2171 = vadd.f32 0.0, %v2170
    %v2172 = vpop.f32.mrb[0].mxu0
    %2173 = vdwg.mxu0
    %v2175 = vrot.slane %v2171, 6
    %v2177 = vadd.f32 %v1573, %v2175
    %v2178 = vxor.u32 %v2177, 2147483648
    %v2179 = vmul.f32 %v2178, 1.442695
    %v2180 = vpow.pop %v2179
    %v2181 = vadd.f32 %v2180, 1.0
    %v2182 = vrcp.pop %v2181
    %v2183 = vmul.f32 1.0, %v2182
    %v2184 = vtanh.pop %v2177
    %v2186 = vrot.slane %v2092, 6
    %v2188 = vmul.f32 %v2183, %v2186
    %2190 = vrot.lane.b32.xlu0 %v2184, 64
    %v2191 = vpop.permute.xlu0 %2190
    %v2193 = vmul.f32 %v2183, %v2191
    %2195 = vrot.lane.b32.xlu0 %v2193, 32
    %v2196 = vpop.permute.xlu0 %2195
    %v2198 = vadd.f32 %v2188, %v2196
    %v2199 = vtanh.pop %v2198
    %2201 = vrot.lane.b32.xlu0 %v2199, 64
    %v2202 = vpop.permute.xlu0 %2201
    %v2204 = vmul.f32 %v2183, %v2202
    %v2206 = vrot.slane %v2204, 2
    %2207 = vrot.lane.b32.xlu0 %v2206, 32
    %v2208 = vpop.permute.xlu0 %2207
    %v2209 = vsel %vm365, %v2208, 0
    %2211 = vmatprep.subr.mxu0 0.0
    %2212 = vmatpush1.msra.mxu0 %v1576
    %2213 = vmatprep.subr.mxu0 0.0
    %2214 = vmatpush1.msra.mxu0 %v1577
    %2215 = vmatprep.subr.mxu0 0.0
    %2216 = vmatpush1.msra.mxu0 %v1578
    %2217 = vmatprep.subr.mxu0 0.0
    %2218 = vmatpush1.msra.mxu0 %v1579
    %2219 = vmatprep.subr.mxu0 0.0
    %2220 = vmatpush1.msra.mxu0 0.0
    %2221 = vmatprep.subr.mxu0 0.0
    %2222 = vmatpush1.msra.mxu0 0.0
    %2223 = vmatprep.subr.mxu0 0.0
    %2224 = vmatpush1.msra.mxu0 0.0
    %2225 = vmatprep.subr.mxu0 0.0
    %2226 = vmatpush1.msra.mxu0 0.0
    %2227 = vmatprep.subr.mxu0 0.0
    %2228 = vmatpush1.msra.mxu0 0.0
    %2229 = vmatprep.subr.mxu0 0.0
    %2230 = vmatpush1.msra.mxu0 0.0
    %2231 = vmatprep.subr.mxu0 0.0
    %2232 = vmatpush1.msra.mxu0 0.0
    %2233 = vmatprep.subr.mxu0 0.0
    %2234 = vmatpush1.msra.mxu0 0.0
    %2235 = vmatprep.subr.mxu0 0.0
    %2236 = vmatpush1.msra.mxu0 0.0
    %2237 = vmatprep.subr.mxu0 0.0
    %2238 = vmatpush1.msra.mxu0 0.0
    %2239 = vmatprep.subr.mxu0 0.0
    %2240 = vmatpush1.msra.mxu0 0.0
    %2241 = vmatprep.subr.mxu0 0.0
    %2242 = vmatpush1.msra.mxu0 0.0
    %2243 = vmatprep.subr.mxu0 0.0
    %2244 = vmatpush1.msra.mxu0 0.0
    %2245 = vmatprep.subr.mxu0 0.0
    %2246 = vmatpush1.msra.mxu0 0.0
    %2247 = vmatprep.subr.mxu0 0.0
    %2248 = vmatpush1.msra.mxu0 0.0
    %2249 = vmatprep.subr.mxu0 0.0
    %2250 = vmatpush1.msra.mxu0 0.0
    %2251 = vmatprep.subr.mxu0 0.0
    %2252 = vmatpush1.msra.mxu0 0.0
    %2253 = vmatprep.subr.mxu0 0.0
    %2254 = vmatpush1.msra.mxu0 0.0
    %2255 = vmatprep.subr.mxu0 0.0
    %2256 = vmatpush1.msra.mxu0 0.0
    %2257 = vmatprep.subr.mxu0 0.0
    %2258 = vmatpush1.msra.mxu0 0.0
    %2259 = vmatprep.subr.mxu0 0.0
    %2260 = vmatpush1.msra.mxu0 0.0
    %2261 = vmatprep.subr.mxu0 0.0
    %2262 = vmatpush1.msra.mxu0 0.0
    %2263 = vmatprep.subr.mxu0 0.0
    %2264 = vmatpush1.msra.mxu0 0.0
    %2265 = vmatprep.subr.mxu0 0.0
    %2266 = vmatpush1.msra.mxu0 0.0
    %2267 = vmatprep.subr.mxu0 0.0
    %2268 = vmatpush1.msra.mxu0 0.0
    %2269 = vmatprep.subr.mxu0 0.0
    %2270 = vmatpush1.msra.mxu0 0.0
    %2271 = vmatprep.subr.mxu0 0.0
    %2272 = vmatpush1.msra.mxu0 0.0
    %2273 = vmatprep.subr.mxu0 0.0
    %2274 = vmatpush1.msra.mxu0 0.0
    %2275 = vmatprep.mubr.f32.mxu0 0.0
    %2276 = vmatmul.mubr.f32.gmra.mrb[0].mxu0 %v2209
    %v2277 = vpop.f32.mrb[0].mxu0
    %v2278 = vadd.f32 0.0, %v2277
    %v2279 = vpop.f32.mrb[0].mxu0
    %2280 = vdwg.mxu0
    %v2282 = vrot.slane %v2278, 4
    %v2284 = vadd.f32 %v1573, %v2282
    %v2285 = vxor.u32 %v2284, 2147483648
    %v2286 = vmul.f32 %v2285, 1.442695
    %v2287 = vpow.pop %v2286
    %v2288 = vadd.f32 %v2287, 1.0
    %v2289 = vrcp.pop %v2288
    %v2290 = vmul.f32 1.0, %v2289
    %v2291 = vtanh.pop %v2284
    %v2293 = vrot.slane %v2198, 6
    %v2295 = vmul.f32 %v2290, %v2293
    %2297 = vrot.lane.b32.xlu0 %v2291, 64
    %v2298 = vpop.permute.xlu0 %2297
    %v2300 = vmul.f32 %v2290, %v2298
    %2302 = vrot.lane.b32.xlu0 %v2300, 32
    %v2303 = vpop.permute.xlu0 %2302
    %v2305 = vadd.f32 %v2295, %v2303
    %v2306 = vtanh.pop %v2305
    %2308 = vrot.lane.b32.xlu0 %v2306, 64
    %v2309 = vpop.permute.xlu0 %2308
    %v2311 = vmul.f32 %v2290, %v2309
    %v2313 = vrot.slane %v2311, 4
    %2314 = vrot.lane.b32.xlu0 %v2313, 32
    %v2315 = vpop.permute.xlu0 %2314
    %v2316 = vsel %vm365, %v2315, 0
    %2318 = vmatprep.subr.mxu0 0.0
    %2319 = vmatpush1.msra.mxu0 %v1576
    %2320 = vmatprep.subr.mxu0 0.0
    %2321 = vmatpush1.msra.mxu0 %v1577
    %2322 = vmatprep.subr.mxu0 0.0
    %2323 = vmatpush1.msra.mxu0 %v1578
    %2324 = vmatprep.subr.mxu0 0.0
    %2325 = vmatpush1.msra.mxu0 %v1579
    %2326 = vmatprep.subr.mxu0 0.0
    %2327 = vmatpush1.msra.mxu0 0.0
    %2328 = vmatprep.subr.mxu0 0.0
    %2329 = vmatpush1.msra.mxu0 0.0
    %2330 = vmatprep.subr.mxu0 0.0
    %2331 = vmatpush1.msra.mxu0 0.0
    %2332 = vmatprep.subr.mxu0 0.0
    %2333 = vmatpush1.msra.mxu0 0.0
    %2334 = vmatprep.subr.mxu0 0.0
    %2335 = vmatpush1.msra.mxu0 0.0
    %2336 = vmatprep.subr.mxu0 0.0
    %2337 = vmatpush1.msra.mxu0 0.0
    %2338 = vmatprep.subr.mxu0 0.0
    %2339 = vmatpush1.msra.mxu0 0.0
    %2340 = vmatprep.subr.mxu0 0.0
    %2341 = vmatpush1.msra.mxu0 0.0
    %2342 = vmatprep.subr.mxu0 0.0
    %2343 = vmatpush1.msra.mxu0 0.0
    %2344 = vmatprep.subr.mxu0 0.0
    %2345 = vmatpush1.msra.mxu0 0.0
    %2346 = vmatprep.subr.mxu0 0.0
    %2347 = vmatpush1.msra.mxu0 0.0
    %2348 = vmatprep.subr.mxu0 0.0
    %2349 = vmatpush1.msra.mxu0 0.0
    %2350 = vmatprep.subr.mxu0 0.0
    %2351 = vmatpush1.msra.mxu0 0.0
    %2352 = vmatprep.subr.mxu0 0.0
    %2353 = vmatpush1.msra.mxu0 0.0
    %2354 = vmatprep.subr.mxu0 0.0
    %2355 = vmatpush1.msra.mxu0 0.0
    %2356 = vmatprep.subr.mxu0 0.0
    %2357 = vmatpush1.msra.mxu0 0.0
    %2358 = vmatprep.subr.mxu0 0.0
    %2359 = vmatpush1.msra.mxu0 0.0
    %2360 = vmatprep.subr.mxu0 0.0
    %2361 = vmatpush1.msra.mxu0 0.0
    %2362 = vmatprep.subr.mxu0 0.0
    %2363 = vmatpush1.msra.mxu0 0.0
    %2364 = vmatprep.subr.mxu0 0.0
    %2365 = vmatpush1.msra.mxu0 0.0
    %2366 = vmatprep.subr.mxu0 0.0
    %2367 = vmatpush1.msra.mxu0 0.0
    %2368 = vmatprep.subr.mxu0 0.0
    %2369 = vmatpush1.msra.mxu0 0.0
    %2370 = vmatprep.subr.mxu0 0.0
    %2371 = vmatpush1.msra.mxu0 0.0
    %2372 = vmatprep.subr.mxu0 0.0
    %2373 = vmatpush1.msra.mxu0 0.0
    %2374 = vmatprep.subr.mxu0 0.0
    %2375 = vmatpush1.msra.mxu0 0.0
    %2376 = vmatprep.subr.mxu0 0.0
    %2377 = vmatpush1.msra.mxu0 0.0
    %2378 = vmatprep.subr.mxu0 0.0
    %2379 = vmatpush1.msra.mxu0 0.0
    %2380 = vmatprep.subr.mxu0 0.0
    %2381 = vmatpush1.msra.mxu0 0.0
    %2382 = vmatprep.mubr.f32.mxu0 0.0
    %2383 = vmatmul.mubr.f32.gmra.mrb[0].mxu0 %v2316
    %v2384 = vpop.f32.mrb[0].mxu0
    %v2385 = vadd.f32 0.0, %v2384
    %v2386 = vpop.f32.mrb[0].mxu0
    %2387 = vdwg.mxu0
    %v2389 = vrot.slane %v2385, 2
    %v2391 = vadd.f32 %v1573, %v2389
    %v2392 = vxor.u32 %v2391, 2147483648
    %v2393 = vmul.f32 %v2392, 1.442695
    %v2394 = vpow.pop %v2393
    %v2395 = vadd.f32 %v2394, 1.0
    %v2396 = vrcp.pop %v2395
    %v2397 = vmul.f32 1.0, %v2396
    %v2398 = vtanh.pop %v2391
    %v2400 = vrot.slane %v2305, 6
    %v2402 = vmul.f32 %v2397, %v2400
    %2404 = vrot.lane.b32.xlu0 %v2398, 64
    %v2405 = vpop.permute.xlu0 %2404
    %v2407 = vmul.f32 %v2397, %v2405
    %2409 = vrot.lane.b32.xlu0 %v2407, 32
    %v2410 = vpop.permute.xlu0 %2409
    %v2412 = vadd.f32 %v2402, %v2410
    %v2413 = vtanh.pop %v2412
    %2415 = vrot.lane.b32.xlu0 %v2413, 64
    %v2416 = vpop.permute.xlu0 %2415
    %v2418 = vmul.f32 %v2397, %v2416
    %v2419 = vld [vmem:[%s11] sm:$0xff]
    %v2420 = vld [vmem:[%s11 + $0x8] sm:$0xff]
    %v2421 = vld [vmem:[%s11 + $0x10] sm:$0xff]
    %v2422 = vld [vmem:[%s11 + $0x18] sm:$0xff]
    %v2423 = vld [vmem:[%s12] sm:$0x1]
    %v2425 = vlaneseq
    %v2426 = vshrl.u32 %v2425, 7
    %v2427 = vsub.s32 0, %v2426
    %v2428 = vrot.slane %v2423, %v2427
    %v2431 = vrot.slane %v2418, 6
    %2432 = vrot.lane.b32.xlu0 %v2431, 32
    %v2433 = vpop.permute.xlu0 %2432
    %v2434 = vsel %vm365, %v2433, 0
    %2436 = vmatprep.subr.mxu0 0.0
    %2437 = vmatpush1.msra.mxu0 %v2419
    %2438 = vmatprep.subr.mxu0 0.0
    %2439 = vmatpush1.msra.mxu0 %v2420
    %2440 = vmatprep.subr.mxu0 0.0
    %2441 = vmatpush1.msra.mxu0 %v2421
    %2442 = vmatprep.subr.mxu0 0.0
    %2443 = vmatpush1.msra.mxu0 %v2422
    %2444 = vmatprep.subr.mxu0 0.0
    %2445 = vmatpush1.msra.mxu0 0.0
    %2446 = vmatprep.subr.mxu0 0.0
    %2447 = vmatpush1.msra.mxu0 0.0
    %2448 = vmatprep.subr.mxu0 0.0
    %2449 = vmatpush1.msra.mxu0 0.0
    %2450 = vmatprep.subr.mxu0 0.0
    %2451 = vmatpush1.msra.mxu0 0.0
    %2452 = vmatprep.subr.mxu0 0.0
    %2453 = vmatpush1.msra.mxu0 0.0
    %2454 = vmatprep.subr.mxu0 0.0
    %2455 = vmatpush1.msra.mxu0 0.0
    %2456 = vmatprep.subr.mxu0 0.0
    %2457 = vmatpush1.msra.mxu0 0.0
    %2458 = vmatprep.subr.mxu0 0.0
    %2459 = vmatpush1.msra.mxu0 0.0
    %2460 = vmatprep.subr.mxu0 0.0
    %2461 = vmatpush1.msra.mxu0 0.0
    %2462 = vmatprep.subr.mxu0 0.0
    %2463 = vmatpush1.msra.mxu0 0.0
    %2464 = vmatprep.subr.mxu0 0.0
    %2465 = vmatpush1.msra.mxu0 0.0
    %2466 = vmatprep.subr.mxu0 0.0
    %2467 = vmatpush1.msra.mxu0 0.0
    %2468 = vmatprep.subr.mxu0 0.0
    %2469 = vmatpush1.msra.mxu0 0.0
    %2470 = vmatprep.subr.mxu0 0.0
    %2471 = vmatpush1.msra.mxu0 0.0
    %2472 = vmatprep.subr.mxu0 0.0
    %2473 = vmatpush1.msra.mxu0 0.0
    %2474 = vmatprep.subr.mxu0 0.0
    %2475 = vmatpush1.msra.mxu0 0.0
    %2476 = vmatprep.subr.mxu0 0.0
    %2477 = vmatpush1.msra.mxu0 0.0
    %2478 = vmatprep.subr.mxu0 0.0
    %2479 = vmatpush1.msra.mxu0 0.0
    %2480 = vmatprep.subr.mxu0 0.0
    %2481 = vmatpush1.msra.mxu0 0.0
    %2482 = vmatprep.subr.mxu0 0.0
    %2483 = vmatpush1.msra.mxu0 0.0
    %2484 = vmatprep.subr.mxu0 0.0
    %2485 = vmatpush1.msra.mxu0 0.0
    %2486 = vmatprep.subr.mxu0 0.0
    %2487 = vmatpush1.msra.mxu0 0.0
    %2488 = vmatprep.subr.mxu0 0.0
    %2489 = vmatpush1.msra.mxu0 0.0
    %2490 = vmatprep.subr.mxu0 0.0
    %2491 = vmatpush1.msra.mxu0 0.0
    %2492 = vmatprep.subr.mxu0 0.0
    %2493 = vmatpush1.msra.mxu0 0.0
    %2494 = vmatprep.subr.mxu0 0.0
    %2495 = vmatpush1.msra.mxu0 0.0
    %2496 = vmatprep.subr.mxu0 0.0
    %2497 = vmatpush1.msra.mxu0 0.0
    %2498 = vmatprep.subr.mxu0 0.0
    %2499 = vmatpush1.msra.mxu0 0.0
    %2500 = vmatprep.mubr.f32.mxu0 0.0
    %2501 = vmatmul.mubr.f32.gmra.mrb[0].mxu0 %v2434
    %v2502 = vpop.f32.mrb[0].mxu0
    %v2503 = vadd.f32 %v2428, %v2502
    %v2504 = vpop.f32.mrb[0].mxu0
    %2505 = vdwg.mxu0
    %vm2506 = vcmask 17408
    %2507 = vst.msk [vmem:[#allocation2] sm:$0x3] %vm2506, %v2503
    // Predicated region
    $region54: #{cnn_lstm_forward.1} parent=1 // pred_check
      _
    $region55: #{cnn_lstm_forward.1} parent=1 // pred_check_branch
      %2509 = sbr.rel (0) target = $region57
    $region56: #{cnn_lstm_forward.1} parent=1 // pred_region
      %s2511 = ssub.s32 32, 32
      %2512 = vsyncadd [#allocation3], %s2511
      %s2514 = sshll.u32 [#allocation2], 4
      %s2515 = int_to_ptr.vmem [resolvable:$true] %s2514
      %2517 = dma.vmem_to_hbm [thread:$0]  %s2515, 32, %s13, [#allocation3]
    $region57: #{cnn_lstm_forward.1} parent=1 // pred_fallthru
      _
    // Predicated region
    $region58: #{cnn_lstm_forward.1} parent=1 // pred_check
      _
    $region59: #{cnn_lstm_forward.1} parent=1 // pred_check_branch
      %2519 = sbr.rel (0) target = $region61
    $region60: #{cnn_lstm_forward.1} parent=1 // pred_region
      %2520 = dma.done [#allocation3], 32
    $region61: #{cnn_lstm_forward.1} parent=1 // pred_fallthru
      _
    %2521 = vsyncpa [#allocation3], 1

</llo_original>
